<compile_context>
chip_gen: v7x
topology: tpu7x:2x2x1
jax: 0.10.0
libtpu: 0.0.40
codegen_flags: <defaults>
</compile_context>

<pallas_src>
import functools

import jax
import jax.numpy as jnp
from jax import lax
from jax.experimental import pallas as pl
from jax.experimental.pallas import tpu as pltpu


def _fasttext_kernel(tok_ref, big_ref, mask_ref, emb_ref, bemb_ref, w_ref, b_ref,
                     pred_ref, *, inv_seq_len):
    """One batch tile: fused gather (bag-of-words) -> masked mean -> linear -> argmax.

    tok_ref : (bB, S)        i32   token ids
    big_ref : (n_bi, bB, S)  i32   bigram ids (lane-dense per column)
    mask_ref: (bB, S)        f32
    emb_ref : (V, E)         f32   token embedding table (resident)
    bemb_ref: (Vb, Eb)       f32   bigram embedding table (resident)
    w_ref   : (H, T)         f32   linear weight, pre-transposed (resident)
    b_ref   : (1, T)         f32   linear bias (resident)
    pred_ref: (bB, 1)        i32
    """
    mask = mask_ref[...]                                   # (bB, S) f32
    bB, S = mask.shape
    V, E = emb_ref.shape
    Vb, Eb = bemb_ref.shape
    n_bi = big_ref.shape[0]

    w = w_ref[...]                                         # (H, T) f32, tiny

    def weighted_counts(ids, vocab):
        # ids: (bB, S) i32 -> mask-weighted bag-of-words counts (bB, vocab) f32.
        # vocab on sublanes, S stays on lanes: no relayout of ids/mask, and the
        # reduction over S is a plain lane reduce.
        iota = lax.broadcasted_iota(jnp.int32, (bB, vocab, S), 1)
        eq = ids[:, None, :] == iota                       # (bB, vocab, S) bool
        return jnp.sum(jnp.where(eq, mask[:, None, :], 0.0), axis=2)

    # Token part: counts @ table -> context slice, then its weight rows.
    ctx_tok = jnp.dot(weighted_counts(tok_ref[...], V), emb_ref[...],
                      preferred_element_type=jnp.float32)  # (bB, E)
    logits = jnp.dot(ctx_tok, w[0:E, :],
                     preferred_element_type=jnp.float32)   # (bB, T)

    # Bigram parts: same table, distinct weight row blocks (matches torch concat).
    for i in range(n_bi):
        ctx_i = jnp.dot(weighted_counts(big_ref[i], Vb), bemb_ref[...],
                        preferred_element_type=jnp.float32)        # (bB, Eb)
        logits = logits + jnp.dot(ctx_i, w[E + i * Eb:E + (i + 1) * Eb, :],
                                  preferred_element_type=jnp.float32)

    # mean over S folded here (T << H); bias keeps reference scale.
    logits = logits * inv_seq_len + b_ref[...]

    # softmax is monotone -> argmax over raw logits gives the same prediction.
    num_tags = logits.shape[1]
    lmax = jnp.max(logits, axis=1, keepdims=True)
    idx = lax.broadcasted_iota(jnp.int32, logits.shape, 1)
    pred = jnp.min(jnp.where(logits >= lmax, idx, num_tags), axis=1, keepdims=True)
    pred_ref[...] = pred.astype(jnp.int32)


def _round_up(x, m):
    return (x + m - 1) // m * m


def fasttext_forward(tokens, masks, bigram, params, *, block_b=None,
                     vmem_limit_bytes=None):
    """Decode-path forward. Returns int32 predictions of shape (B,)."""
    emb_w = params["embedding"]          # (V, E)
    bemb_w = params["bigram_embedding"]  # (Vb, Eb)
    lin_w = params["linear_w"]           # (T, H)  torch convention (out x in)
    lin_b = params["linear_b"]           # (T,)

    B, S = tokens.shape
    V, E = emb_w.shape
    Vb, Eb = bemb_w.shape
    T, H = lin_w.shape
    n_bi = bigram.shape[2]
    assert H == E + n_bi * Eb, "hidden size mismatch"

    # --- cheap wrapper-side layout plumbing (no big intermediates) ---
    tokens_i = tokens.astype(jnp.int32)                               # (B, S)
    bigram_t = jnp.transpose(bigram.astype(jnp.int32), (2, 0, 1))     # (n_bi, B, S)
    mask_f = masks.astype(jnp.float32)                                # (B, S)
    emb_f = emb_w.astype(jnp.float32)
    bemb_f = bemb_w.astype(jnp.float32)
    w_ht = jnp.transpose(lin_w.astype(jnp.float32))                   # (H, T)
    bias = lin_b.astype(jnp.float32)[None, :]                         # (1, T)

    # Per-generation VMEM budget (v5e/v6e: 128 MiB phys, v7x: 64 MiB phys).
    if vmem_limit_bytes is None:
        cap = 128 * 1024 * 1024
        try:
            cap = int(pltpu.get_tpu_info().vmem_capacity_bytes)
        except Exception:
            pass
        vmem_limit_bytes = int(min(100 * 1024 * 1024,
                                   max(32 * 1024 * 1024, cap * 3 // 4)))

    # Resident (constant-index) operands: tables + linear weight + bias.
    resident_bytes = (V * E + Vb * Eb + H * T + T) * 4

    if block_b is None:
        # Per-row working set: double-buffered ids + mask tiles plus the
        # largest in-kernel one-hot temporary (f32), counted twice for slack.
        per_row = 2 * ((n_bi + 2) * S * 4) + S * max(V, Vb) * 4 * 2
        budget = max(vmem_limit_bytes - 2 * resident_bytes, vmem_limit_bytes // 4)
        block_b = budget // max(per_row, 1)
        block_b = max(8, min(1024, (block_b // 8) * 8))
    block_b = max(8, (min(block_b, _round_up(B, 8)) // 8) * 8)

    b_pad = _round_up(B, block_b)
    # v7x megacore: keep >=2 "parallel" grid steps when the batch allows it.
    if b_pad // block_b < 2 and b_pad >= 16:
        block_b = min(block_b, _round_up((b_pad + 1) // 2, 8))
        b_pad = _round_up(B, block_b)

    if b_pad != B:
        # Padded rows: ids=0, mask=0 -> counts=0 -> logits=bias -> finite preds,
        # sliced off below.
        pad = b_pad - B
        tokens_i = jnp.pad(tokens_i, ((0, pad), (0, 0)))
        bigram_t = jnp.pad(bigram_t, ((0, 0), (0, pad), (0, 0)))
        mask_f = jnp.pad(mask_f, ((0, pad), (0, 0)))

    grid = (b_pad // block_b,)

    flops = int(3 * b_pad * S * (V + n_bi * Vb)
                + 2 * b_pad * (V * E + n_bi * Vb * Eb + H * T))
    bytes_accessed = int(b_pad * S * 4 * (2 + n_bi)        # ids + bigram + mask
                         + resident_bytes                  # tables + linear
                         + b_pad * 4)                      # predictions

    pred = pl.pallas_call(
        functools.partial(_fasttext_kernel, inv_seq_len=1.0 / S),
        out_shape=jax.ShapeDtypeStruct((b_pad, 1), jnp.int32),
        grid=grid,
        in_specs=[
            pl.BlockSpec((block_b, S), lambda i: (i, 0)),        # token ids tile
            pl.BlockSpec((n_bi, block_b, S), lambda i: (0, i, 0)),  # bigram ids tile
            pl.BlockSpec((block_b, S), lambda i: (i, 0)),        # mask tile
            pl.BlockSpec((V, E), lambda i: (0, 0)),              # emb table, resident
            pl.BlockSpec((Vb, Eb), lambda i: (0, 0)),            # bigram table, resident
            pl.BlockSpec((H, T), lambda i: (0, 0)),              # weight (H,T), resident
            pl.BlockSpec((1, T), lambda i: (0, 0)),              # bias, resident
        ],
        out_specs=pl.BlockSpec((block_b, 1), lambda i: (i, 0)),
        compiler_params=pltpu.CompilerParams(
            dimension_semantics=("parallel",),
            vmem_limit_bytes=vmem_limit_bytes,
        ),
        cost_estimate=pl.CostEstimate(
            flops=flops, transcendentals=0, bytes_accessed=bytes_accessed),
    )(tokens_i, bigram_t, mask_f, emb_f, bemb_f, w_ht, bias)

    return pred[:B, 0]


def make_params(key, num_tags, vocab_size, embed_size,
                bigram_vocab_size, bigram_embed_size):
    k1, k2, k3, k4 = jax.random.split(key, 4)
    hidden = embed_size + 2 * bigram_embed_size
    return {
        "embedding": jax.random.normal(k1, (vocab_size, embed_size), jnp.float32),
        "bigram_embedding": jax.random.normal(
            k2, (bigram_vocab_size, bigram_embed_size), jnp.float32),
        "linear_w": 0.1 * jax.random.normal(k3, (num_tags, hidden), jnp.float32),
        "linear_b": 0.1 * jax.random.normal(k4, (num_tags,), jnp.float32),
    }


def _reference(tokens, masks, bigram, params):
    """Pure-JAX f32 reference (gather -> concat -> masked mean -> linear -> argmax)."""
    embed = params["embedding"][tokens]
    embed_bi = jnp.concatenate(
        [params["bigram_embedding"][bigram[:, :, i]] for i in range(bigram.shape[2])],
        axis=2)
    embed = jnp.concatenate([embed, embed_bi], axis=2)
    context = jnp.mean(embed * masks.astype(jnp.float32)[:, :, None], axis=1)
    out = context @ params["linear_w"].T + params["linear_b"]
    return jnp.argmax(jax.nn.softmax(out, axis=1), axis=1).astype(jnp.int32)


if __name__ == "__main__":
    # small shapes consistent with the module
    B, S = 2, 8
    num_tags = 8
    vocab_size = 50
    embed_size = 32
    bigram_vocab_size = 30
    bigram_embed_size = 16   # hidden = 32 + 2*16 = 64

    key = jax.random.PRNGKey(0)
    kp, kt, km, kb = jax.random.split(key, 4)

    params = make_params(kp, num_tags, vocab_size, embed_size,
                         bigram_vocab_size, bigram_embed_size)

    tokens = jax.random.randint(kt, (B, S), 0, vocab_size, jnp.int32)
    masks = jax.random.bernoulli(km, 0.8, (B, S)).astype(jnp.float32)
    bigram = jax.random.randint(kb, (B, S, 2), 0, bigram_vocab_size, jnp.int32)

    pred = fasttext_forward(tokens, masks, bigram, params)
    pred = jax.block_until_ready(pred)

    ref = jax.block_until_ready(_reference(tokens, masks, bigram, params))
    assert pred.shape == (B,)
    assert (pred == ref).all(), (pred, ref)

    print("KERNEL_OK")
</pallas_src>

<mosaic_0001>
module attributes {stable_mosaic.version = 11 : i64} {
  func.func @_fasttext_kernel(%arg0: i32, %arg1: memref<8x8xi32, #tpu.memory_space<vmem>>, %arg2: memref<2x8x8xi32, #tpu.memory_space<vmem>>, %arg3: memref<8x8xf32, #tpu.memory_space<vmem>>, %arg4: memref<50x32xf32, #tpu.memory_space<vmem>>, %arg5: memref<30x16xf32, #tpu.memory_space<vmem>>, %arg6: memref<64x8xf32, #tpu.memory_space<vmem>>, %arg7: memref<1x8xf32, #tpu.memory_space<vmem>>, %arg8: memref<8x1xi32, #tpu.memory_space<vmem>>) attributes {dimension_semantics = [#tpu.dimension_semantics<parallel>], iteration_bounds = array<i64: 1>, scalar_prefetch = 0 : i64, scratch_operands = 0 : i64, tpu.core_type = #tpu.core_type<tc>, window_params = [{transform_indices = @transform_0, window_bounds = array<i64: 8, 8>}, {transform_indices = @transform_1, window_bounds = array<i64: 2, 8, 8>}, {transform_indices = @transform_2, window_bounds = array<i64: 8, 8>}, {pipeline_mode = #tpu.pipeline_mode<synchronous>, transform_indices = @transform_3, window_bounds = array<i64: 50, 32>}, {pipeline_mode = #tpu.pipeline_mode<synchronous>, transform_indices = @transform_4, window_bounds = array<i64: 30, 16>}, {pipeline_mode = #tpu.pipeline_mode<synchronous>, transform_indices = @transform_5, window_bounds = array<i64: 64, 8>}, {pipeline_mode = #tpu.pipeline_mode<synchronous>, transform_indices = @transform_6, window_bounds = array<i64: 1, 8>}, {transform_indices = @transform_7, window_bounds = array<i64: 8, 1>}]} {
    %c0 = arith.constant 0 : index
    %c0_0 = arith.constant 0 : index
    %0 = vector.load %arg3[%c0, %c0_0] : memref<8x8xf32, #tpu.memory_space<vmem>>, vector<8x8xf32>
    %c0_1 = arith.constant 0 : index
    %c0_2 = arith.constant 0 : index
    %1 = vector.load %arg6[%c0_1, %c0_2] : memref<64x8xf32, #tpu.memory_space<vmem>>, vector<64x8xf32>
    %c0_3 = arith.constant 0 : index
    %c0_4 = arith.constant 0 : index
    %2 = vector.load %arg1[%c0_3, %c0_4] : memref<8x8xi32, #tpu.memory_space<vmem>>, vector<8x8xi32>
    %3 = tpu.iota {dimensions = array<i32: 1>} : vector<8x50x8xi32>
    %4 = vector.shape_cast %2 : vector<8x8xi32> to vector<8x1x8xi32>
    %5 = vector.broadcast %4 : vector<8x1x8xi32> to vector<8x50x8xi32>
    %6 = arith.cmpi eq, %5, %3 : vector<8x50x8xi32>
    %7 = vector.shape_cast %0 : vector<8x8xf32> to vector<8x1x8xf32>
    %cst = arith.constant 0.000000e+00 : f32
    %8 = vector.shape_cast %7 : vector<8x1x8xf32> to vector<8x1x8xf32>
    %9 = vector.broadcast %8 : vector<8x1x8xf32> to vector<8x50x8xf32>
    %10 = vector.broadcast %cst : f32 to vector<8x50x8xf32>
    %11 = arith.select %6, %9, %10 : vector<8x50x8xi1>, vector<8x50x8xf32>
    %cst_5 = arith.constant dense<0.000000e+00> : vector<8x50xf32>
    %12 = vector.multi_reduction <add>, %11, %cst_5 [2] : vector<8x50x8xf32> to vector<8x50xf32>
    %c0_6 = arith.constant 0 : index
    %c0_7 = arith.constant 0 : index
    %13 = vector.load %arg4[%c0_6, %c0_7] : memref<50x32xf32, #tpu.memory_space<vmem>>, vector<50x32xf32>
    %cst_8 = arith.constant dense<0.000000e+00> : vector<8x32xf32>
    %14 = tpu.matmul %12, %13, %cst_8 {dimension_numbers = #tpu.dot_dimension_numbers<[1], [0], [0], [1], [0, 0, 1, 1], [], []>} : vector<8x50xf32>, vector<50x32xf32>, vector<8x32xf32> -> vector<8x32xf32>
    %15 = vector.extract_strided_slice %1 {offsets = [0, 0], sizes = [32, 8], strides = [1, 1]} : vector<64x8xf32> to vector<32x8xf32>
    %cst_9 = arith.constant dense<0.000000e+00> : vector<8x8xf32>
    %16 = tpu.matmul %14, %15, %cst_9 {dimension_numbers = #tpu.dot_dimension_numbers<[1], [0], [0], [1], [0, 0, 1, 1], [], []>} : vector<8x32xf32>, vector<32x8xf32>, vector<8x8xf32> -> vector<8x8xf32>
    %c0_10 = arith.constant 0 : index
    %c0_11 = arith.constant 0 : index
    %c0_12 = arith.constant 0 : index
    %17 = vector.load %arg2[%c0_10, %c0_11, %c0_12] : memref<2x8x8xi32, #tpu.memory_space<vmem>>, vector<1x8x8xi32>
    %18 = vector.shape_cast %17 : vector<1x8x8xi32> to vector<8x8xi32>
    %19 = tpu.iota {dimensions = array<i32: 1>} : vector<8x30x8xi32>
    %20 = vector.shape_cast %18 : vector<8x8xi32> to vector<8x1x8xi32>
    %21 = vector.broadcast %20 : vector<8x1x8xi32> to vector<8x30x8xi32>
    %22 = arith.cmpi eq, %21, %19 : vector<8x30x8xi32>
    %23 = vector.shape_cast %0 : vector<8x8xf32> to vector<8x1x8xf32>
    %cst_13 = arith.constant 0.000000e+00 : f32
    %24 = vector.shape_cast %23 : vector<8x1x8xf32> to vector<8x1x8xf32>
    %25 = vector.broadcast %24 : vector<8x1x8xf32> to vector<8x30x8xf32>
    %26 = vector.broadcast %cst_13 : f32 to vector<8x30x8xf32>
    %27 = arith.select %22, %25, %26 : vector<8x30x8xi1>, vector<8x30x8xf32>
    %cst_14 = arith.constant dense<0.000000e+00> : vector<8x30xf32>
    %28 = vector.multi_reduction <add>, %27, %cst_14 [2] : vector<8x30x8xf32> to vector<8x30xf32>
    %c0_15 = arith.constant 0 : index
    %c0_16 = arith.constant 0 : index
    %29 = vector.load %arg5[%c0_15, %c0_16] : memref<30x16xf32, #tpu.memory_space<vmem>>, vector<30x16xf32>
    %cst_17 = arith.constant dense<0.000000e+00> : vector<8x16xf32>
    %30 = tpu.matmul %28, %29, %cst_17 {dimension_numbers = #tpu.dot_dimension_numbers<[1], [0], [0], [1], [0, 0, 1, 1], [], []>} : vector<8x30xf32>, vector<30x16xf32>, vector<8x16xf32> -> vector<8x16xf32>
    %31 = vector.extract_strided_slice %1 {offsets = [32, 0], sizes = [16, 8], strides = [1, 1]} : vector<64x8xf32> to vector<16x8xf32>
    %cst_18 = arith.constant dense<0.000000e+00> : vector<8x8xf32>
    %32 = tpu.matmul %30, %31, %cst_18 {dimension_numbers = #tpu.dot_dimension_numbers<[1], [0], [0], [1], [0, 0, 1, 1], [], []>} : vector<8x16xf32>, vector<16x8xf32>, vector<8x8xf32> -> vector<8x8xf32>
    %33 = arith.addf %16, %32 : vector<8x8xf32>
    %c1 = arith.constant 1 : index
    %c0_19 = arith.constant 0 : index
    %c0_20 = arith.constant 0 : index
    %34 = vector.load %arg2[%c1, %c0_19, %c0_20] : memref<2x8x8xi32, #tpu.memory_space<vmem>>, vector<1x8x8xi32>
    %35 = vector.shape_cast %34 : vector<1x8x8xi32> to vector<8x8xi32>
    %36 = tpu.iota {dimensions = array<i32: 1>} : vector<8x30x8xi32>
    %37 = vector.shape_cast %35 : vector<8x8xi32> to vector<8x1x8xi32>
    %38 = vector.broadcast %37 : vector<8x1x8xi32> to vector<8x30x8xi32>
    %39 = arith.cmpi eq, %38, %36 : vector<8x30x8xi32>
    %40 = vector.shape_cast %0 : vector<8x8xf32> to vector<8x1x8xf32>
    %cst_21 = arith.constant 0.000000e+00 : f32
    %41 = vector.shape_cast %40 : vector<8x1x8xf32> to vector<8x1x8xf32>
    %42 = vector.broadcast %41 : vector<8x1x8xf32> to vector<8x30x8xf32>
    %43 = vector.broadcast %cst_21 : f32 to vector<8x30x8xf32>
    %44 = arith.select %39, %42, %43 : vector<8x30x8xi1>, vector<8x30x8xf32>
    %cst_22 = arith.constant dense<0.000000e+00> : vector<8x30xf32>
    %45 = vector.multi_reduction <add>, %44, %cst_22 [2] : vector<8x30x8xf32> to vector<8x30xf32>
    %c0_23 = arith.constant 0 : index
    %c0_24 = arith.constant 0 : index
    %46 = vector.load %arg5[%c0_23, %c0_24] : memref<30x16xf32, #tpu.memory_space<vmem>>, vector<30x16xf32>
    %cst_25 = arith.constant dense<0.000000e+00> : vector<8x16xf32>
    %47 = tpu.matmul %45, %46, %cst_25 {dimension_numbers = #tpu.dot_dimension_numbers<[1], [0], [0], [1], [0, 0, 1, 1], [], []>} : vector<8x30xf32>, vector<30x16xf32>, vector<8x16xf32> -> vector<8x16xf32>
    %48 = vector.extract_strided_slice %1 {offsets = [48, 0], sizes = [16, 8], strides = [1, 1]} : vector<64x8xf32> to vector<16x8xf32>
    %cst_26 = arith.constant dense<0.000000e+00> : vector<8x8xf32>
    %49 = tpu.matmul %47, %48, %cst_26 {dimension_numbers = #tpu.dot_dimension_numbers<[1], [0], [0], [1], [0, 0, 1, 1], [], []>} : vector<8x16xf32>, vector<16x8xf32>, vector<8x8xf32> -> vector<8x8xf32>
    %50 = arith.addf %33, %49 : vector<8x8xf32>
    %cst_27 = arith.constant 1.250000e-01 : f32
    %51 = vector.broadcast %cst_27 : f32 to vector<8x8xf32>
    %52 = arith.mulf %50, %51 : vector<8x8xf32>
    %c0_28 = arith.constant 0 : index
    %c0_29 = arith.constant 0 : index
    %53 = vector.load %arg7[%c0_28, %c0_29] : memref<1x8xf32, #tpu.memory_space<vmem>>, vector<1x8xf32>
    %54 = vector.broadcast %53 : vector<1x8xf32> to vector<8x8xf32>
    %55 = arith.addf %52, %54 : vector<8x8xf32>
    %cst_30 = arith.constant dense<0xFF800000> : vector<8xf32>
    %56 = vector.multi_reduction <maximumf>, %55, %cst_30 [1] : vector<8x8xf32> to vector<8xf32>
    %57 = vector.shape_cast %56 : vector<8xf32> to vector<8x1xf32>
    %58 = tpu.iota {dimensions = array<i32: 1>} : vector<8x8xi32>
    %59 = vector.broadcast %57 : vector<8x1xf32> to vector<8x8xf32>
    %60 = arith.cmpf oge, %55, %59 : vector<8x8xf32>
    %c8_i32 = arith.constant 8 : i32
    %61 = vector.broadcast %c8_i32 : i32 to vector<8x8xi32>
    %62 = arith.select %60, %58, %61 : vector<8x8xi1>, vector<8x8xi32>
    %cst_31 = arith.constant dense<2147483647> : vector<8xi32>
    %63 = vector.multi_reduction <minsi>, %62, %cst_31 [1] : vector<8x8xi32> to vector<8xi32>
    %64 = vector.shape_cast %63 : vector<8xi32> to vector<8x1xi32>
    %c0_32 = arith.constant 0 : index
    %c0_33 = arith.constant 0 : index
    %65 = vector.load %arg8[%c0_32, %c0_33] : memref<8x1xi32, #tpu.memory_space<vmem>>, vector<8x1xi32>
    tpu.vector_store %arg8[%c0_32, %c0_33], %64 {strides = array<i32>} : memref<8x1xi32, #tpu.memory_space<vmem>>, vector<8x1xi32>,
    return
  }
  func.func @transform_0(%arg0: i32) -> (i32, i32) {
    %c0_i32 = arith.constant 0 : i32
    %c0_i32_0 = arith.constant 0 : i32
    return %arg0, %c0_i32 : i32, i32
  }
  func.func @transform_1(%arg0: i32) -> (i32, i32, i32) {
    %c0_i32 = arith.constant 0 : i32
    %c0_i32_0 = arith.constant 0 : i32
    %c0_i32_1 = arith.constant 0 : i32
    return %c0_i32, %arg0, %c0_i32_0 : i32, i32, i32
  }
  func.func @transform_2(%arg0: i32) -> (i32, i32) {
    %c0_i32 = arith.constant 0 : i32
    %c0_i32_0 = arith.constant 0 : i32
    return %arg0, %c0_i32 : i32, i32
  }
  func.func @transform_3(%arg0: i32) -> (i32, i32) {
    %c0_i32 = arith.constant 0 : i32
    %c0_i32_0 = arith.constant 0 : i32
    %c0_i32_1 = arith.constant 0 : i32
    return %c0_i32, %c0_i32_0 : i32, i32
  }
  func.func @transform_4(%arg0: i32) -> (i32, i32) {
    %c0_i32 = arith.constant 0 : i32
    %c0_i32_0 = arith.constant 0 : i32
    %c0_i32_1 = arith.constant 0 : i32
    return %c0_i32, %c0_i32_0 : i32, i32
  }
  func.func @transform_5(%arg0: i32) -> (i32, i32) {
    %c0_i32 = arith.constant 0 : i32
    %c0_i32_0 = arith.constant 0 : i32
    %c0_i32_1 = arith.constant 0 : i32
    return %c0_i32, %c0_i32_0 : i32, i32
  }
  func.func @transform_6(%arg0: i32) -> (i32, i32) {
    %c0_i32 = arith.constant 0 : i32
    %c0_i32_0 = arith.constant 0 : i32
    %c0_i32_1 = arith.constant 0 : i32
    return %c0_i32, %c0_i32_0 : i32, i32
  }
  func.func @transform_7(%arg0: i32) -> (i32, i32) {
    %c0_i32 = arith.constant 0 : i32
    %c0_i32_0 = arith.constant 0 : i32
    return %arg0, %c0_i32 : i32, i32
  }
}

</mosaic_0001>

<llo_original>
// kernel: tpu_custom_call.1
$region0: #{tpu_custom_call.1}
  #allocation0 [shape = 'u32[]', space=smem, size = 0x4, offset = 0x4, fixed_abs, tag = 'smem constant byte address 0x4 - core index']
  #allocation1 [shape = 'u32[144,128]{1,0:T(1,128)}', space=vmem, size = 0x12000, scoped, tag = 'internal scratch']
  %s0 = inlined_call_operand.hbm [shape: s32[8,8], index: 0, kind: input, shape index: {}]
  %s1 = inlined_call_operand.hbm [shape: s32[2,8,8], index: 1, kind: input, shape index: {}]
  %s2 = inlined_call_operand.hbm [shape: f32[8,8], index: 2, kind: input, shape index: {}]
  %s3 = inlined_call_operand.hbm [shape: f32[50,32], index: 3, kind: input, shape index: {}]
  %s4 = inlined_call_operand.hbm [shape: f32[30,16], index: 4, kind: input, shape index: {}]
  %s5 = inlined_call_operand.hbm [shape: f32[64,8], index: 5, kind: input, shape index: {}]
  %s6 = inlined_call_operand.hbm [shape: f32[1,8], index: 6, kind: input, shape index: {}]
  %s7 = inlined_call_operand.hbm [shape: s32[8,1], index: 7, kind: output, shape index: {}]
  %s8 = sld [smem:[#allocation0]]
  $region66: #{tpu_custom_call.1} parent=0
    _
  %s10 = ssub.s32 1, %s8
  %s11 = scalar_select 0, %s10, %s8
  $region1: #{tpu_custom_call.1} parent=0
    #allocation2 [shape = 'u8[4096]{0}', space=vmem, size = 0x1000, scoped, tag = 'input window, operand 0, single buffered']
    #allocation3 [shape = 's32[1]{0}', space=sflag, size = 0x4, scoped, tag = 'scoped memory for tpu_custom_call.1']
    #allocation4 [shape = 's32[1]{0}', space=sflag, size = 0x4, scoped, tag = 'scoped memory for tpu_custom_call.1']
    #allocation5 [shape = 'u8[8192]{0}', space=vmem, size = 0x2000, scoped, tag = 'input window, operand 1, single buffered']
    #allocation6 [shape = 's32[1]{0}', space=sflag, size = 0x4, scoped, tag = 'scoped memory for tpu_custom_call.1']
    #allocation7 [shape = 'u8[4096]{0}', space=vmem, size = 0x1000, scoped, tag = 'input window, operand 2, single buffered']
    #allocation8 [shape = 'u8[28672]{0}', space=vmem, size = 0x7000, scoped, tag = 'input window, operand 3, single buffered']
    #allocation9 [shape = 's32[1]{0}', space=sflag, size = 0x4, scoped, tag = 'scoped memory for tpu_custom_call.1']
    #allocation10 [shape = 'u8[16384]{0}', space=vmem, size = 0x4000, scoped, tag = 'input window, operand 4, single buffered']
    #allocation11 [shape = 'u8[32768]{0}', space=vmem, size = 0x8000, scoped, tag = 'input window, operand 5, single buffered']
    #allocation12 [shape = 's32[1]{0}', space=sflag, size = 0x4, scoped, tag = 'scoped memory for tpu_custom_call.1']
    #allocation13 [shape = 'u8[512]{0}', space=vmem, size = 0x400, scoped, tag = 'input window, operand 6, single buffered']
    #allocation14 [shape = 'u8[4096]{0}', space=vmem, size = 0x1000, scoped, tag = 'output window, operand 0, single buffered']
    %12 = vsyncpa [#allocation3], 0
    %13 = vsyncpa [#allocation6], 0
    %14 = vsyncpa [#allocation9], 0
    %15 = vsyncpa [#allocation12], 0
    %16 = vsyncpa [#allocation4], 0
    // Predicated region
    $region2: #{tpu_custom_call.1} parent=1 // pred_check
      _
    $region3: #{tpu_custom_call.1} parent=1 // pred_check_branch
      %18 = sbr.rel (0) target = $region5
    $region4: #{tpu_custom_call.1} parent=1 // pred_region
      %s20 = ssub.s32 128, 128
      %21 = vsyncadd [#allocation3], %s20
      %s23 = sshll.u32 [#allocation2], 4
      %s24 = int_to_ptr.vmem [resolvable:$true] %s23
      %26 = dma.hbm_to_vmem [thread:$0]  %s0, 128, %s24, [#allocation3]
    $region5: #{tpu_custom_call.1} parent=1 // pred_fallthru
      _
    // Predicated region
    $region6: #{tpu_custom_call.1} parent=1 // pred_check
      _
    $region7: #{tpu_custom_call.1} parent=1 // pred_check_branch
      %28 = sbr.rel (0) target = $region9
    $region8: #{tpu_custom_call.1} parent=1 // pred_region
      %s30 = ssub.s32 256, 256
      %31 = vsyncadd [#allocation6], %s30
      %s32 = sshll.u32 [#allocation5], 4
      %s33 = int_to_ptr.vmem [resolvable:$true] %s32
      %38 = dma.hbm_to_vmem [thread:$0]  %s1, 256, %s33, [#allocation6], 128, 128, 8
    $region9: #{tpu_custom_call.1} parent=1 // pred_fallthru
      _
    // Predicated region
    $region10: #{tpu_custom_call.1} parent=1 // pred_check
      _
    $region11: #{tpu_custom_call.1} parent=1 // pred_check_branch
      %40 = sbr.rel (0) target = $region13
    $region12: #{tpu_custom_call.1} parent=1 // pred_region
      %s42 = ssub.s32 128, 128
      %43 = vsyncadd [#allocation6], %s42
      %s45 = sshll.u32 [#allocation7], 4
      %s46 = int_to_ptr.vmem [resolvable:$true] %s45
      %48 = dma.hbm_to_vmem [thread:$0]  %s2, 128, %s46, [#allocation6]
    $region13: #{tpu_custom_call.1} parent=1 // pred_fallthru
      _
    // Predicated region
    $region14: #{tpu_custom_call.1} parent=1 // pred_check
      _
    $region15: #{tpu_custom_call.1} parent=1 // pred_check_branch
      %50 = sbr.rel (0) target = $region17
    $region16: #{tpu_custom_call.1} parent=1 // pred_region
      %s52 = ssub.s32 896, 896
      %53 = vsyncadd [#allocation9], %s52
      %s54 = sshll.u32 [#allocation8], 4
      %s55 = int_to_ptr.vmem [resolvable:$true] %s54
      %60 = dma.hbm_to_vmem [thread:$0]  %s3, 896, %s55, [#allocation9], 128, 128, 8
    $region17: #{tpu_custom_call.1} parent=1 // pred_fallthru
      _
    // Predicated region
    $region18: #{tpu_custom_call.1} parent=1 // pred_check
      _
    $region19: #{tpu_custom_call.1} parent=1 // pred_check_branch
      %62 = sbr.rel (0) target = $region21
    $region20: #{tpu_custom_call.1} parent=1 // pred_region
      %s64 = ssub.s32 512, 512
      %65 = vsyncadd [#allocation9], %s64
      %s66 = sshll.u32 [#allocation10], 4
      %s67 = int_to_ptr.vmem [resolvable:$true] %s66
      %72 = dma.hbm_to_vmem [thread:$0]  %s4, 512, %s67, [#allocation9], 128, 128, 8
    $region21: #{tpu_custom_call.1} parent=1 // pred_fallthru
      _
    // Predicated region
    $region22: #{tpu_custom_call.1} parent=1 // pred_check
      _
    $region23: #{tpu_custom_call.1} parent=1 // pred_check_branch
      %74 = sbr.rel (0) target = $region25
    $region24: #{tpu_custom_call.1} parent=1 // pred_region
      %s76 = ssub.s32 1024, 1024
      %77 = vsyncadd [#allocation12], %s76
      %s78 = sshll.u32 [#allocation11], 4
      %s79 = int_to_ptr.vmem [resolvable:$true] %s78
      %84 = dma.hbm_to_vmem [thread:$0]  %s5, 1024, %s79, [#allocation12], 128, 128, 8
    $region25: #{tpu_custom_call.1} parent=1 // pred_fallthru
      _
    // Predicated region
    $region26: #{tpu_custom_call.1} parent=1 // pred_check
      _
    $region27: #{tpu_custom_call.1} parent=1 // pred_check_branch
      %86 = sbr.rel (0) target = $region29
    $region28: #{tpu_custom_call.1} parent=1 // pred_region
      %s88 = ssub.s32 16, 16
      %89 = vsyncadd [#allocation12], %s88
      %s91 = sshll.u32 [#allocation13], 4
      %s92 = int_to_ptr.vmem [resolvable:$true] %s91
      %94 = dma.hbm_to_vmem [thread:$0]  %s6, 16, %s92, [#allocation12]
    $region29: #{tpu_custom_call.1} parent=1 // pred_fallthru
      _
    // Predicated region
    $region30: #{tpu_custom_call.1} parent=1 // pred_check
      _
    $region31: #{tpu_custom_call.1} parent=1 // pred_check_branch
      %96 = sbr.rel (0) target = $region33
    $region32: #{tpu_custom_call.1} parent=1 // pred_region
      %97 = dma.done [#allocation3], 128
    $region33: #{tpu_custom_call.1} parent=1 // pred_fallthru
      _
    // Predicated region
    $region34: #{tpu_custom_call.1} parent=1 // pred_check
      _
    $region35: #{tpu_custom_call.1} parent=1 // pred_check_branch
      %99 = sbr.rel (0) target = $region37
    $region36: #{tpu_custom_call.1} parent=1 // pred_region
      %100 = dma.done [#allocation6], 256
    $region37: #{tpu_custom_call.1} parent=1 // pred_fallthru
      _
    // Predicated region
    $region38: #{tpu_custom_call.1} parent=1 // pred_check
      _
    $region39: #{tpu_custom_call.1} parent=1 // pred_check_branch
      %102 = sbr.rel (0) target = $region41
    $region40: #{tpu_custom_call.1} parent=1 // pred_region
      %103 = dma.done [#allocation6], 128
    $region41: #{tpu_custom_call.1} parent=1 // pred_fallthru
      _
    // Predicated region
    $region42: #{tpu_custom_call.1} parent=1 // pred_check
      _
    $region43: #{tpu_custom_call.1} parent=1 // pred_check_branch
      %105 = sbr.rel (0) target = $region45
    $region44: #{tpu_custom_call.1} parent=1 // pred_region
      %106 = dma.done [#allocation9], 896
    $region45: #{tpu_custom_call.1} parent=1 // pred_fallthru
      _
    // Predicated region
    $region46: #{tpu_custom_call.1} parent=1 // pred_check
      _
    $region47: #{tpu_custom_call.1} parent=1 // pred_check_branch
      %108 = sbr.rel (0) target = $region49
    $region48: #{tpu_custom_call.1} parent=1 // pred_region
      %109 = dma.done [#allocation9], 512
    $region49: #{tpu_custom_call.1} parent=1 // pred_fallthru
      _
    // Predicated region
    $region50: #{tpu_custom_call.1} parent=1 // pred_check
      _
    $region51: #{tpu_custom_call.1} parent=1 // pred_check_branch
      %111 = sbr.rel (0) target = $region53
    $region52: #{tpu_custom_call.1} parent=1 // pred_region
      %112 = dma.done [#allocation12], 1024
    $region53: #{tpu_custom_call.1} parent=1 // pred_fallthru
      _
    // Predicated region
    $region54: #{tpu_custom_call.1} parent=1 // pred_check
      _
    $region55: #{tpu_custom_call.1} parent=1 // pred_check_branch
      %114 = sbr.rel (0) target = $region57
    $region56: #{tpu_custom_call.1} parent=1 // pred_region
      %115 = dma.done [#allocation12], 16
    $region57: #{tpu_custom_call.1} parent=1 // pred_fallthru
      _
    %v116 = vld [vmem:[#allocation7] sm:$0xff]
    %v117 = vld [vmem:[#allocation11] sm:$0xff]
    %v118 = vld [vmem:[#allocation11 + $0x8] sm:$0xff]
    %v119 = vld [vmem:[#allocation11 + $0x10] sm:$0xff]
    %v120 = vld [vmem:[#allocation11 + $0x18] sm:$0xff]
    %v121 = vld [vmem:[#allocation11 + $0x20] sm:$0xff]
    %v122 = vld [vmem:[#allocation11 + $0x28] sm:$0xff]
    %v123 = vld [vmem:[#allocation11 + $0x30] sm:$0xff]
    %v124 = vld [vmem:[#allocation11 + $0x38] sm:$0xff]
    %v125 = vld [vmem:[#allocation2] sm:$0xff]
    %v126 = vlaneseq
    %v127 = vshrl.u32 %v126, 7
    %v128 = vadd.s32 %v127, 8
    %v129 = vadd.s32 %v127, 16
    %v130 = vadd.s32 %v127, 24
    %v131 = vadd.s32 %v127, 32
    %v132 = vadd.s32 %v127, 40
    %v133 = vadd.s32 %v127, 48
    %v134 = vcombine.high %v125, %v125
    %v136 = vunpack.c.l.s4 1966171168
    %v137 = vunpack.c.0.s8 %v136
    %v138 = vlaneseq
    %v139 = vshrl.u32 %v138, 7
    %v140 = vsub.s32 %v137, %v139
    %v141 = vrot.slane %v125, %v140
    %v143 = vunpack.c.l.s4 1966171168
    %v144 = vunpack.c.0.s8 %v143
    %v145 = vlaneseq
    %v146 = vshrl.u32 %v145, 7
    %v147 = vsub.s32 %v144, %v146
    %v148 = vrot.slane %v134, %v147
    %v149 = vcombine.high %v141, %v141
    %v150 = vcombine.high %v148, %v148
    %v152 = vunpack.c.l.s4 1966171168
    %v153 = vunpack.c.0.s8 %v152
    %v154 = vlaneseq
    %v155 = vshrl.u32 %v154, 7
    %v156 = vsub.s32 %v153, %v155
    %v157 = vrot.slane %v141, %v156
    %v159 = vunpack.c.l.s4 1966171168
    %v160 = vunpack.c.0.s8 %v159
    %v161 = vlaneseq
    %v162 = vshrl.u32 %v161, 7
    %v163 = vsub.s32 %v160, %v162
    %v164 = vrot.slane %v148, %v163
    %v166 = vunpack.c.l.s4 1966171168
    %v167 = vunpack.c.0.s8 %v166
    %v168 = vlaneseq
    %v169 = vshrl.u32 %v168, 7
    %v170 = vsub.s32 %v167, %v169
    %v171 = vrot.slane %v149, %v170
    %v173 = vunpack.c.l.s4 1966171168
    %v174 = vunpack.c.0.s8 %v173
    %v175 = vlaneseq
    %v176 = vshrl.u32 %v175, 7
    %v177 = vsub.s32 %v174, %v176
    %v178 = vrot.slane %v150, %v177
    %v179 = vcombine.high %v157, %v157
    %v180 = vcombine.high %v164, %v164
    %v181 = vcombine.high %v171, %v171
    %v182 = vcombine.high %v178, %v178
    %v183 = vlaneseq
    %v184 = vshrl.u32 %v183, 7
    %v185 = vsub.s32 0, %v184
    %v186 = vrot.slane %v157, %v185
    %v187 = vlaneseq
    %v188 = vshrl.u32 %v187, 7
    %v189 = vsub.s32 0, %v188
    %v190 = vrot.slane %v171, %v189
    %v191 = vlaneseq
    %v192 = vshrl.u32 %v191, 7
    %v193 = vsub.s32 0, %v192
    %v194 = vrot.slane %v179, %v193
    %v195 = vlaneseq
    %v196 = vshrl.u32 %v195, 7
    %v197 = vsub.s32 0, %v196
    %v198 = vrot.slane %v181, %v197
    %v199 = vlaneseq
    %v200 = vshrl.u32 %v199, 7
    %v201 = vsub.s32 0, %v200
    %v202 = vrot.slane %v164, %v201
    %v203 = vlaneseq
    %v204 = vshrl.u32 %v203, 7
    %v205 = vsub.s32 0, %v204
    %v206 = vrot.slane %v178, %v205
    %v207 = vlaneseq
    %v208 = vshrl.u32 %v207, 7
    %v209 = vsub.s32 0, %v208
    %v210 = vrot.slane %v180, %v209
    %v211 = vlaneseq
    %v212 = vshrl.u32 %v211, 7
    %v213 = vsub.s32 0, %v212
    %v214 = vrot.slane %v182, %v213
    %vm215 = vcmp.eq.s32.totalorder %v186, %v127
    %vm216 = vcmp.eq.s32.totalorder %v186, %v128
    %vm217 = vcmp.eq.s32.totalorder %v186, %v129
    %vm218 = vcmp.eq.s32.totalorder %v186, %v130
    %vm219 = vcmp.eq.s32.totalorder %v186, %v131
    %vm220 = vcmp.eq.s32.totalorder %v186, %v132
    %vm221 = vcmp.eq.s32.totalorder %v186, %v133
    %vm222 = vcmp.eq.s32.totalorder %v190, %v127
    %vm223 = vcmp.eq.s32.totalorder %v190, %v128
    %vm224 = vcmp.eq.s32.totalorder %v190, %v129
    %vm225 = vcmp.eq.s32.totalorder %v190, %v130
    %vm226 = vcmp.eq.s32.totalorder %v190, %v131
    %vm227 = vcmp.eq.s32.totalorder %v190, %v132
    %vm228 = vcmp.eq.s32.totalorder %v190, %v133
    %vm229 = vcmp.eq.s32.totalorder %v194, %v127
    %vm230 = vcmp.eq.s32.totalorder %v194, %v128
    %vm231 = vcmp.eq.s32.totalorder %v194, %v129
    %vm232 = vcmp.eq.s32.totalorder %v194, %v130
    %vm233 = vcmp.eq.s32.totalorder %v194, %v131
    %vm234 = vcmp.eq.s32.totalorder %v194, %v132
    %vm235 = vcmp.eq.s32.totalorder %v194, %v133
    %vm236 = vcmp.eq.s32.totalorder %v198, %v127
    %vm237 = vcmp.eq.s32.totalorder %v198, %v128
    %vm238 = vcmp.eq.s32.totalorder %v198, %v129
    %vm239 = vcmp.eq.s32.totalorder %v198, %v130
    %vm240 = vcmp.eq.s32.totalorder %v198, %v131
    %vm241 = vcmp.eq.s32.totalorder %v198, %v132
    %vm242 = vcmp.eq.s32.totalorder %v198, %v133
    %vm243 = vcmp.eq.s32.totalorder %v202, %v127
    %vm244 = vcmp.eq.s32.totalorder %v202, %v128
    %vm245 = vcmp.eq.s32.totalorder %v202, %v129
    %vm246 = vcmp.eq.s32.totalorder %v202, %v130
    %vm247 = vcmp.eq.s32.totalorder %v202, %v131
    %vm248 = vcmp.eq.s32.totalorder %v202, %v132
    %vm249 = vcmp.eq.s32.totalorder %v202, %v133
    %vm250 = vcmp.eq.s32.totalorder %v206, %v127
    %vm251 = vcmp.eq.s32.totalorder %v206, %v128
    %vm252 = vcmp.eq.s32.totalorder %v206, %v129
    %vm253 = vcmp.eq.s32.totalorder %v206, %v130
    %vm254 = vcmp.eq.s32.totalorder %v206, %v131
    %vm255 = vcmp.eq.s32.totalorder %v206, %v132
    %vm256 = vcmp.eq.s32.totalorder %v206, %v133
    %vm257 = vcmp.eq.s32.totalorder %v210, %v127
    %vm258 = vcmp.eq.s32.totalorder %v210, %v128
    %vm259 = vcmp.eq.s32.totalorder %v210, %v129
    %vm260 = vcmp.eq.s32.totalorder %v210, %v130
    %vm261 = vcmp.eq.s32.totalorder %v210, %v131
    %vm262 = vcmp.eq.s32.totalorder %v210, %v132
    %vm263 = vcmp.eq.s32.totalorder %v210, %v133
    %vm264 = vcmp.eq.s32.totalorder %v214, %v127
    %vm265 = vcmp.eq.s32.totalorder %v214, %v128
    %vm266 = vcmp.eq.s32.totalorder %v214, %v129
    %vm267 = vcmp.eq.s32.totalorder %v214, %v130
    %vm268 = vcmp.eq.s32.totalorder %v214, %v131
    %vm269 = vcmp.eq.s32.totalorder %v214, %v132
    %vm270 = vcmp.eq.s32.totalorder %v214, %v133
    %v272 = vcombine.high %v116, %v116
    %v274 = vunpack.c.l.s4 1966171168
    %v275 = vunpack.c.0.s8 %v274
    %v276 = vlaneseq
    %v277 = vshrl.u32 %v276, 7
    %v278 = vsub.s32 %v275, %v277
    %v279 = vrot.slane %v116, %v278
    %v281 = vunpack.c.l.s4 1966171168
    %v282 = vunpack.c.0.s8 %v281
    %v283 = vlaneseq
    %v284 = vshrl.u32 %v283, 7
    %v285 = vsub.s32 %v282, %v284
    %v286 = vrot.slane %v272, %v285
    %v287 = vcombine.high %v279, %v279
    %v288 = vcombine.high %v286, %v286
    %v290 = vunpack.c.l.s4 1966171168
    %v291 = vunpack.c.0.s8 %v290
    %v292 = vlaneseq
    %v293 = vshrl.u32 %v292, 7
    %v294 = vsub.s32 %v291, %v293
    %v295 = vrot.slane %v279, %v294
    %v297 = vunpack.c.l.s4 1966171168
    %v298 = vunpack.c.0.s8 %v297
    %v299 = vlaneseq
    %v300 = vshrl.u32 %v299, 7
    %v301 = vsub.s32 %v298, %v300
    %v302 = vrot.slane %v286, %v301
    %v304 = vunpack.c.l.s4 1966171168
    %v305 = vunpack.c.0.s8 %v304
    %v306 = vlaneseq
    %v307 = vshrl.u32 %v306, 7
    %v308 = vsub.s32 %v305, %v307
    %v309 = vrot.slane %v287, %v308
    %v311 = vunpack.c.l.s4 1966171168
    %v312 = vunpack.c.0.s8 %v311
    %v313 = vlaneseq
    %v314 = vshrl.u32 %v313, 7
    %v315 = vsub.s32 %v312, %v314
    %v316 = vrot.slane %v288, %v315
    %v317 = vcombine.high %v295, %v295
    %v318 = vcombine.high %v302, %v302
    %v319 = vcombine.high %v309, %v309
    %v320 = vcombine.high %v316, %v316
    %v321 = vlaneseq
    %v322 = vshrl.u32 %v321, 7
    %v323 = vsub.s32 0, %v322
    %v324 = vrot.slane %v295, %v323
    %v325 = vlaneseq
    %v326 = vshrl.u32 %v325, 7
    %v327 = vsub.s32 0, %v326
    %v328 = vrot.slane %v309, %v327
    %v329 = vlaneseq
    %v330 = vshrl.u32 %v329, 7
    %v331 = vsub.s32 0, %v330
    %v332 = vrot.slane %v317, %v331
    %v333 = vlaneseq
    %v334 = vshrl.u32 %v333, 7
    %v335 = vsub.s32 0, %v334
    %v336 = vrot.slane %v319, %v335
    %v337 = vlaneseq
    %v338 = vshrl.u32 %v337, 7
    %v339 = vsub.s32 0, %v338
    %v340 = vrot.slane %v302, %v339
    %v341 = vlaneseq
    %v342 = vshrl.u32 %v341, 7
    %v343 = vsub.s32 0, %v342
    %v344 = vrot.slane %v316, %v343
    %v345 = vlaneseq
    %v346 = vshrl.u32 %v345, 7
    %v347 = vsub.s32 0, %v346
    %v348 = vrot.slane %v318, %v347
    %v349 = vlaneseq
    %v350 = vshrl.u32 %v349, 7
    %v351 = vsub.s32 0, %v350
    %v352 = vrot.slane %v320, %v351
    %v361 = vsel %vm215, %v324, 0.0
    %v362 = vsel %vm216, %v324, 0.0
    %v363 = vsel %vm217, %v324, 0.0
    %v364 = vsel %vm218, %v324, 0.0
    %v365 = vsel %vm219, %v324, 0.0
    %v366 = vsel %vm220, %v324, 0.0
    %v367 = vsel %vm221, %v324, 0.0
    %v368 = vsel %vm222, %v328, 0.0
    %v369 = vsel %vm223, %v328, 0.0
    %v370 = vsel %vm224, %v328, 0.0
    %v371 = vsel %vm225, %v328, 0.0
    %v372 = vsel %vm226, %v328, 0.0
    %v373 = vsel %vm227, %v328, 0.0
    %v374 = vsel %vm228, %v328, 0.0
    %v375 = vsel %vm229, %v332, 0.0
    %v376 = vsel %vm230, %v332, 0.0
    %v377 = vsel %vm231, %v332, 0.0
    %v378 = vsel %vm232, %v332, 0.0
    %v379 = vsel %vm233, %v332, 0.0
    %v380 = vsel %vm234, %v332, 0.0
    %v381 = vsel %vm235, %v332, 0.0
    %v382 = vsel %vm236, %v336, 0.0
    %v383 = vsel %vm237, %v336, 0.0
    %v384 = vsel %vm238, %v336, 0.0
    %v385 = vsel %vm239, %v336, 0.0
    %v386 = vsel %vm240, %v336, 0.0
    %v387 = vsel %vm241, %v336, 0.0
    %v388 = vsel %vm242, %v336, 0.0
    %v389 = vsel %vm243, %v340, 0.0
    %v390 = vsel %vm244, %v340, 0.0
    %v391 = vsel %vm245, %v340, 0.0
    %v392 = vsel %vm246, %v340, 0.0
    %v393 = vsel %vm247, %v340, 0.0
    %v394 = vsel %vm248, %v340, 0.0
    %v395 = vsel %vm249, %v340, 0.0
    %v396 = vsel %vm250, %v344, 0.0
    %v397 = vsel %vm251, %v344, 0.0
    %v398 = vsel %vm252, %v344, 0.0
    %v399 = vsel %vm253, %v344, 0.0
    %v400 = vsel %vm254, %v344, 0.0
    %v401 = vsel %vm255, %v344, 0.0
    %v402 = vsel %vm256, %v344, 0.0
    %v403 = vsel %vm257, %v348, 0.0
    %v404 = vsel %vm258, %v348, 0.0
    %v405 = vsel %vm259, %v348, 0.0
    %v406 = vsel %vm260, %v348, 0.0
    %v407 = vsel %vm261, %v348, 0.0
    %v408 = vsel %vm262, %v348, 0.0
    %v409 = vsel %vm263, %v348, 0.0
    %v410 = vsel %vm264, %v352, 0.0
    %v411 = vsel %vm265, %v352, 0.0
    %v412 = vsel %vm266, %v352, 0.0
    %v413 = vsel %vm267, %v352, 0.0
    %v414 = vsel %vm268, %v352, 0.0
    %v415 = vsel %vm269, %v352, 0.0
    %v416 = vsel %vm270, %v352, 0.0
    %vm417 = vcmask 64512
    %v418 = vsel %vm417, %v361, 0.0
    %419 = vadd.xlane.f32.xlu0 %v418
    %v420 = vpop.xlane.xlu0 %419
    %v421 = vsel %vm417, %v362, 0.0
    %422 = vadd.xlane.f32.xlu0 %v421
    %v423 = vpop.xlane.xlu0 %422
    %v424 = vsel %vm417, %v363, 0.0
    %425 = vadd.xlane.f32.xlu0 %v424
    %v426 = vpop.xlane.xlu0 %425
    %v427 = vsel %vm417, %v364, 0.0
    %428 = vadd.xlane.f32.xlu0 %v427
    %v429 = vpop.xlane.xlu0 %428
    %v430 = vsel %vm417, %v365, 0.0
    %431 = vadd.xlane.f32.xlu0 %v430
    %v432 = vpop.xlane.xlu0 %431
    %v433 = vsel %vm417, %v366, 0.0
    %434 = vadd.xlane.f32.xlu0 %v433
    %v435 = vpop.xlane.xlu0 %434
    %vm436 = vcmask 58368
    %v437 = vsel %vm436, %v367, 0.0
    %438 = vadd.xlane.f32.xlu0 %v437
    %v439 = vpop.xlane.xlu0 %438
    %v440 = vsel %vm417, %v368, 0.0
    %441 = vadd.xlane.f32.xlu0 %v440
    %v442 = vpop.xlane.xlu0 %441
    %v443 = vsel %vm417, %v369, 0.0
    %444 = vadd.xlane.f32.xlu0 %v443
    %v445 = vpop.xlane.xlu0 %444
    %v446 = vsel %vm417, %v370, 0.0
    %447 = vadd.xlane.f32.xlu0 %v446
    %v448 = vpop.xlane.xlu0 %447
    %v449 = vsel %vm417, %v371, 0.0
    %450 = vadd.xlane.f32.xlu0 %v449
    %v451 = vpop.xlane.xlu0 %450
    %v452 = vsel %vm417, %v372, 0.0
    %453 = vadd.xlane.f32.xlu0 %v452
    %v454 = vpop.xlane.xlu0 %453
    %v455 = vsel %vm417, %v373, 0.0
    %456 = vadd.xlane.f32.xlu0 %v455
    %v457 = vpop.xlane.xlu0 %456
    %v458 = vsel %vm436, %v374, 0.0
    %459 = vadd.xlane.f32.xlu0 %v458
    %v460 = vpop.xlane.xlu0 %459
    %v461 = vsel %vm417, %v375, 0.0
    %462 = vadd.xlane.f32.xlu0 %v461
    %v463 = vpop.xlane.xlu0 %462
    %v464 = vsel %vm417, %v376, 0.0
    %465 = vadd.xlane.f32.xlu0 %v464
    %v466 = vpop.xlane.xlu0 %465
    %v467 = vsel %vm417, %v377, 0.0
    %468 = vadd.xlane.f32.xlu0 %v467
    %v469 = vpop.xlane.xlu0 %468
    %v470 = vsel %vm417, %v378, 0.0
    %471 = vadd.xlane.f32.xlu0 %v470
    %v472 = vpop.xlane.xlu0 %471
    %v473 = vsel %vm417, %v379, 0.0
    %474 = vadd.xlane.f32.xlu0 %v473
    %v475 = vpop.xlane.xlu0 %474
    %v476 = vsel %vm417, %v380, 0.0
    %477 = vadd.xlane.f32.xlu0 %v476
    %v478 = vpop.xlane.xlu0 %477
    %v479 = vsel %vm436, %v381, 0.0
    %480 = vadd.xlane.f32.xlu0 %v479
    %v481 = vpop.xlane.xlu0 %480
    %v482 = vsel %vm417, %v382, 0.0
    %483 = vadd.xlane.f32.xlu0 %v482
    %v484 = vpop.xlane.xlu0 %483
    %v485 = vsel %vm417, %v383, 0.0
    %486 = vadd.xlane.f32.xlu0 %v485
    %v487 = vpop.xlane.xlu0 %486
    %v488 = vsel %vm417, %v384, 0.0
    %489 = vadd.xlane.f32.xlu0 %v488
    %v490 = vpop.xlane.xlu0 %489
    %v491 = vsel %vm417, %v385, 0.0
    %492 = vadd.xlane.f32.xlu0 %v491
    %v493 = vpop.xlane.xlu0 %492
    %v494 = vsel %vm417, %v386, 0.0
    %495 = vadd.xlane.f32.xlu0 %v494
    %v496 = vpop.xlane.xlu0 %495
    %v497 = vsel %vm417, %v387, 0.0
    %498 = vadd.xlane.f32.xlu0 %v497
    %v499 = vpop.xlane.xlu0 %498
    %v500 = vsel %vm436, %v388, 0.0
    %501 = vadd.xlane.f32.xlu0 %v500
    %v502 = vpop.xlane.xlu0 %501
    %v503 = vsel %vm417, %v389, 0.0
    %504 = vadd.xlane.f32.xlu0 %v503
    %v505 = vpop.xlane.xlu0 %504
    %v506 = vsel %vm417, %v390, 0.0
    %507 = vadd.xlane.f32.xlu0 %v506
    %v508 = vpop.xlane.xlu0 %507
    %v509 = vsel %vm417, %v391, 0.0
    %510 = vadd.xlane.f32.xlu0 %v509
    %v511 = vpop.xlane.xlu0 %510
    %v512 = vsel %vm417, %v392, 0.0
    %513 = vadd.xlane.f32.xlu0 %v512
    %v514 = vpop.xlane.xlu0 %513
    %v515 = vsel %vm417, %v393, 0.0
    %516 = vadd.xlane.f32.xlu0 %v515
    %v517 = vpop.xlane.xlu0 %516
    %v518 = vsel %vm417, %v394, 0.0
    %519 = vadd.xlane.f32.xlu0 %v518
    %v520 = vpop.xlane.xlu0 %519
    %v521 = vsel %vm436, %v395, 0.0
    %522 = vadd.xlane.f32.xlu0 %v521
    %v523 = vpop.xlane.xlu0 %522
    %v524 = vsel %vm417, %v396, 0.0
    %525 = vadd.xlane.f32.xlu0 %v524
    %v526 = vpop.xlane.xlu0 %525
    %v527 = vsel %vm417, %v397, 0.0
    %528 = vadd.xlane.f32.xlu0 %v527
    %v529 = vpop.xlane.xlu0 %528
    %v530 = vsel %vm417, %v398, 0.0
    %531 = vadd.xlane.f32.xlu0 %v530
    %v532 = vpop.xlane.xlu0 %531
    %v533 = vsel %vm417, %v399, 0.0
    %534 = vadd.xlane.f32.xlu0 %v533
    %v535 = vpop.xlane.xlu0 %534
    %v536 = vsel %vm417, %v400, 0.0
    %537 = vadd.xlane.f32.xlu0 %v536
    %v538 = vpop.xlane.xlu0 %537
    %v539 = vsel %vm417, %v401, 0.0
    %540 = vadd.xlane.f32.xlu0 %v539
    %v541 = vpop.xlane.xlu0 %540
    %v542 = vsel %vm436, %v402, 0.0
    %543 = vadd.xlane.f32.xlu0 %v542
    %v544 = vpop.xlane.xlu0 %543
    %v545 = vsel %vm417, %v403, 0.0
    %546 = vadd.xlane.f32.xlu0 %v545
    %v547 = vpop.xlane.xlu0 %546
    %v548 = vsel %vm417, %v404, 0.0
    %549 = vadd.xlane.f32.xlu0 %v548
    %v550 = vpop.xlane.xlu0 %549
    %v551 = vsel %vm417, %v405, 0.0
    %552 = vadd.xlane.f32.xlu0 %v551
    %v553 = vpop.xlane.xlu0 %552
    %v554 = vsel %vm417, %v406, 0.0
    %555 = vadd.xlane.f32.xlu0 %v554
    %v556 = vpop.xlane.xlu0 %555
    %v557 = vsel %vm417, %v407, 0.0
    %558 = vadd.xlane.f32.xlu0 %v557
    %v559 = vpop.xlane.xlu0 %558
    %v560 = vsel %vm417, %v408, 0.0
    %561 = vadd.xlane.f32.xlu0 %v560
    %v562 = vpop.xlane.xlu0 %561
    %v563 = vsel %vm436, %v409, 0.0
    %564 = vadd.xlane.f32.xlu0 %v563
    %v565 = vpop.xlane.xlu0 %564
    %v566 = vsel %vm417, %v410, 0.0
    %567 = vadd.xlane.f32.xlu0 %v566
    %v568 = vpop.xlane.xlu0 %567
    %v569 = vsel %vm417, %v411, 0.0
    %570 = vadd.xlane.f32.xlu0 %v569
    %v571 = vpop.xlane.xlu0 %570
    %v572 = vsel %vm417, %v412, 0.0
    %573 = vadd.xlane.f32.xlu0 %v572
    %v574 = vpop.xlane.xlu0 %573
    %v575 = vsel %vm417, %v413, 0.0
    %576 = vadd.xlane.f32.xlu0 %v575
    %v577 = vpop.xlane.xlu0 %576
    %v578 = vsel %vm417, %v414, 0.0
    %579 = vadd.xlane.f32.xlu0 %v578
    %v580 = vpop.xlane.xlu0 %579
    %v581 = vsel %vm417, %v415, 0.0
    %582 = vadd.xlane.f32.xlu0 %v581
    %v583 = vpop.xlane.xlu0 %582
    %v584 = vsel %vm436, %v416, 0.0
    %585 = vadd.xlane.f32.xlu0 %v584
    %v586 = vpop.xlane.xlu0 %585
    %v587 = vld [vmem:[#allocation8] sm:$0xff]
    %v588 = vld [vmem:[#allocation8 + $0x8] sm:$0xff]
    %v589 = vld [vmem:[#allocation8 + $0x10] sm:$0xff]
    %v590 = vld [vmem:[#allocation8 + $0x18] sm:$0xff]
    %v591 = vld [vmem:[#allocation8 + $0x20] sm:$0xff]
    %v592 = vld [vmem:[#allocation8 + $0x28] sm:$0xff]
    %v593 = vld [vmem:[#allocation8 + $0x30] sm:$0x3]
    %v650 = vlaneseq
    %v651 = vand.u32 %v650, 127
    %v652 = vlaneseq
    %v653 = vshrl.u32 %v652, 7
    %v654 = vsub.s32 %v651, %v653
    %v655 = vrot.slane %v420, %v654
    %v656 = vadd.s32 %v651, 4294967288
    %v657 = vlaneseq
    %v658 = vshrl.u32 %v657, 7
    %v659 = vsub.s32 %v656, %v658
    %v660 = vrot.slane %v423, %v659
    %vm661 = vcmask 130112
    %v662 = vsel %vm661, %v660, %v655
    %v663 = vadd.s32 %v651, 4294967280
    %v664 = vlaneseq
    %v665 = vshrl.u32 %v664, 7
    %v666 = vsub.s32 %v663, %v665
    %v667 = vrot.slane %v426, %v666
    %vm668 = vcmask 195712
    %v669 = vsel %vm668, %v667, %v662
    %v670 = vadd.s32 %v651, 4294967272
    %v671 = vlaneseq
    %v672 = vshrl.u32 %v671, 7
    %v673 = vsub.s32 %v670, %v672
    %v674 = vrot.slane %v429, %v673
    %vm675 = vcmask 261312
    %v676 = vsel %vm675, %v674, %v669
    %v677 = vadd.s32 %v651, 4294967264
    %v678 = vlaneseq
    %v679 = vshrl.u32 %v678, 7
    %v680 = vsub.s32 %v677, %v679
    %v681 = vrot.slane %v432, %v680
    %vm682 = vcmask 326912
    %v683 = vsel %vm682, %v681, %v676
    %v684 = vadd.s32 %v651, 4294967256
    %v685 = vlaneseq
    %v686 = vshrl.u32 %v685, 7
    %v687 = vsub.s32 %v684, %v686
    %v688 = vrot.slane %v435, %v687
    %vm689 = vcmask 392512
    %v690 = vsel %vm689, %v688, %v683
    %v691 = vadd.s32 %v651, 4294967248
    %v692 = vlaneseq
    %v693 = vshrl.u32 %v692, 7
    %v694 = vsub.s32 %v691, %v693
    %v695 = vrot.slane %v439, %v694
    %vm696 = vcmask 458112
    %v697 = vsel %vm696, %v695, %v690
    %v698 = vlaneseq
    %v699 = vshrl.u32 %v698, 7
    %v700 = vsub.s32 %v651, %v699
    %v701 = vrot.slane %v442, %v700
    %v702 = vlaneseq
    %v703 = vshrl.u32 %v702, 7
    %v704 = vsub.s32 %v656, %v703
    %v705 = vrot.slane %v445, %v704
    %v706 = vsel %vm661, %v705, %v701
    %v707 = vlaneseq
    %v708 = vshrl.u32 %v707, 7
    %v709 = vsub.s32 %v663, %v708
    %v710 = vrot.slane %v448, %v709
    %v711 = vsel %vm668, %v710, %v706
    %v712 = vlaneseq
    %v713 = vshrl.u32 %v712, 7
    %v714 = vsub.s32 %v670, %v713
    %v715 = vrot.slane %v451, %v714
    %v716 = vsel %vm675, %v715, %v711
    %v717 = vlaneseq
    %v718 = vshrl.u32 %v717, 7
    %v719 = vsub.s32 %v677, %v718
    %v720 = vrot.slane %v454, %v719
    %v721 = vsel %vm682, %v720, %v716
    %v722 = vlaneseq
    %v723 = vshrl.u32 %v722, 7
    %v724 = vsub.s32 %v684, %v723
    %v725 = vrot.slane %v457, %v724
    %v726 = vsel %vm689, %v725, %v721
    %v727 = vlaneseq
    %v728 = vshrl.u32 %v727, 7
    %v729 = vsub.s32 %v691, %v728
    %v730 = vrot.slane %v460, %v729
    %v731 = vsel %vm696, %v730, %v726
    %v732 = vlaneseq
    %v733 = vshrl.u32 %v732, 7
    %v734 = vsub.s32 %v651, %v733
    %v735 = vrot.slane %v463, %v734
    %v736 = vlaneseq
    %v737 = vshrl.u32 %v736, 7
    %v738 = vsub.s32 %v656, %v737
    %v739 = vrot.slane %v466, %v738
    %v740 = vsel %vm661, %v739, %v735
    %v741 = vlaneseq
    %v742 = vshrl.u32 %v741, 7
    %v743 = vsub.s32 %v663, %v742
    %v744 = vrot.slane %v469, %v743
    %v745 = vsel %vm668, %v744, %v740
    %v746 = vlaneseq
    %v747 = vshrl.u32 %v746, 7
    %v748 = vsub.s32 %v670, %v747
    %v749 = vrot.slane %v472, %v748
    %v750 = vsel %vm675, %v749, %v745
    %v751 = vlaneseq
    %v752 = vshrl.u32 %v751, 7
    %v753 = vsub.s32 %v677, %v752
    %v754 = vrot.slane %v475, %v753
    %v755 = vsel %vm682, %v754, %v750
    %v756 = vlaneseq
    %v757 = vshrl.u32 %v756, 7
    %v758 = vsub.s32 %v684, %v757
    %v759 = vrot.slane %v478, %v758
    %v760 = vsel %vm689, %v759, %v755
    %v761 = vlaneseq
    %v762 = vshrl.u32 %v761, 7
    %v763 = vsub.s32 %v691, %v762
    %v764 = vrot.slane %v481, %v763
    %v765 = vsel %vm696, %v764, %v760
    %v766 = vlaneseq
    %v767 = vshrl.u32 %v766, 7
    %v768 = vsub.s32 %v651, %v767
    %v769 = vrot.slane %v484, %v768
    %v770 = vlaneseq
    %v771 = vshrl.u32 %v770, 7
    %v772 = vsub.s32 %v656, %v771
    %v773 = vrot.slane %v487, %v772
    %v774 = vsel %vm661, %v773, %v769
    %v775 = vlaneseq
    %v776 = vshrl.u32 %v775, 7
    %v777 = vsub.s32 %v663, %v776
    %v778 = vrot.slane %v490, %v777
    %v779 = vsel %vm668, %v778, %v774
    %v780 = vlaneseq
    %v781 = vshrl.u32 %v780, 7
    %v782 = vsub.s32 %v670, %v781
    %v783 = vrot.slane %v493, %v782
    %v784 = vsel %vm675, %v783, %v779
    %v785 = vlaneseq
    %v786 = vshrl.u32 %v785, 7
    %v787 = vsub.s32 %v677, %v786
    %v788 = vrot.slane %v496, %v787
    %v789 = vsel %vm682, %v788, %v784
    %v790 = vlaneseq
    %v791 = vshrl.u32 %v790, 7
    %v792 = vsub.s32 %v684, %v791
    %v793 = vrot.slane %v499, %v792
    %v794 = vsel %vm689, %v793, %v789
    %v795 = vlaneseq
    %v796 = vshrl.u32 %v795, 7
    %v797 = vsub.s32 %v691, %v796
    %v798 = vrot.slane %v502, %v797
    %v799 = vsel %vm696, %v798, %v794
    %v800 = vlaneseq
    %v801 = vshrl.u32 %v800, 7
    %v802 = vsub.s32 %v651, %v801
    %v803 = vrot.slane %v505, %v802
    %v804 = vlaneseq
    %v805 = vshrl.u32 %v804, 7
    %v806 = vsub.s32 %v656, %v805
    %v807 = vrot.slane %v508, %v806
    %v808 = vsel %vm661, %v807, %v803
    %v809 = vlaneseq
    %v810 = vshrl.u32 %v809, 7
    %v811 = vsub.s32 %v663, %v810
    %v812 = vrot.slane %v511, %v811
    %v813 = vsel %vm668, %v812, %v808
    %v814 = vlaneseq
    %v815 = vshrl.u32 %v814, 7
    %v816 = vsub.s32 %v670, %v815
    %v817 = vrot.slane %v514, %v816
    %v818 = vsel %vm675, %v817, %v813
    %v819 = vlaneseq
    %v820 = vshrl.u32 %v819, 7
    %v821 = vsub.s32 %v677, %v820
    %v822 = vrot.slane %v517, %v821
    %v823 = vsel %vm682, %v822, %v818
    %v824 = vlaneseq
    %v825 = vshrl.u32 %v824, 7
    %v826 = vsub.s32 %v684, %v825
    %v827 = vrot.slane %v520, %v826
    %v828 = vsel %vm689, %v827, %v823
    %v829 = vlaneseq
    %v830 = vshrl.u32 %v829, 7
    %v831 = vsub.s32 %v691, %v830
    %v832 = vrot.slane %v523, %v831
    %v833 = vsel %vm696, %v832, %v828
    %v834 = vlaneseq
    %v835 = vshrl.u32 %v834, 7
    %v836 = vsub.s32 %v651, %v835
    %v837 = vrot.slane %v526, %v836
    %v838 = vlaneseq
    %v839 = vshrl.u32 %v838, 7
    %v840 = vsub.s32 %v656, %v839
    %v841 = vrot.slane %v529, %v840
    %v842 = vsel %vm661, %v841, %v837
    %v843 = vlaneseq
    %v844 = vshrl.u32 %v843, 7
    %v845 = vsub.s32 %v663, %v844
    %v846 = vrot.slane %v532, %v845
    %v847 = vsel %vm668, %v846, %v842
    %v848 = vlaneseq
    %v849 = vshrl.u32 %v848, 7
    %v850 = vsub.s32 %v670, %v849
    %v851 = vrot.slane %v535, %v850
    %v852 = vsel %vm675, %v851, %v847
    %v853 = vlaneseq
    %v854 = vshrl.u32 %v853, 7
    %v855 = vsub.s32 %v677, %v854
    %v856 = vrot.slane %v538, %v855
    %v857 = vsel %vm682, %v856, %v852
    %v858 = vlaneseq
    %v859 = vshrl.u32 %v858, 7
    %v860 = vsub.s32 %v684, %v859
    %v861 = vrot.slane %v541, %v860
    %v862 = vsel %vm689, %v861, %v857
    %v863 = vlaneseq
    %v864 = vshrl.u32 %v863, 7
    %v865 = vsub.s32 %v691, %v864
    %v866 = vrot.slane %v544, %v865
    %v867 = vsel %vm696, %v866, %v862
    %v868 = vlaneseq
    %v869 = vshrl.u32 %v868, 7
    %v870 = vsub.s32 %v651, %v869
    %v871 = vrot.slane %v547, %v870
    %v872 = vlaneseq
    %v873 = vshrl.u32 %v872, 7
    %v874 = vsub.s32 %v656, %v873
    %v875 = vrot.slane %v550, %v874
    %v876 = vsel %vm661, %v875, %v871
    %v877 = vlaneseq
    %v878 = vshrl.u32 %v877, 7
    %v879 = vsub.s32 %v663, %v878
    %v880 = vrot.slane %v553, %v879
    %v881 = vsel %vm668, %v880, %v876
    %v882 = vlaneseq
    %v883 = vshrl.u32 %v882, 7
    %v884 = vsub.s32 %v670, %v883
    %v885 = vrot.slane %v556, %v884
    %v886 = vsel %vm675, %v885, %v881
    %v887 = vlaneseq
    %v888 = vshrl.u32 %v887, 7
    %v889 = vsub.s32 %v677, %v888
    %v890 = vrot.slane %v559, %v889
    %v891 = vsel %vm682, %v890, %v886
    %v892 = vlaneseq
    %v893 = vshrl.u32 %v892, 7
    %v894 = vsub.s32 %v684, %v893
    %v895 = vrot.slane %v562, %v894
    %v896 = vsel %vm689, %v895, %v891
    %v897 = vlaneseq
    %v898 = vshrl.u32 %v897, 7
    %v899 = vsub.s32 %v691, %v898
    %v900 = vrot.slane %v565, %v899
    %v901 = vsel %vm696, %v900, %v896
    %v902 = vlaneseq
    %v903 = vshrl.u32 %v902, 7
    %v904 = vsub.s32 %v651, %v903
    %v905 = vrot.slane %v568, %v904
    %v906 = vlaneseq
    %v907 = vshrl.u32 %v906, 7
    %v908 = vsub.s32 %v656, %v907
    %v909 = vrot.slane %v571, %v908
    %v910 = vsel %vm661, %v909, %v905
    %v911 = vlaneseq
    %v912 = vshrl.u32 %v911, 7
    %v913 = vsub.s32 %v663, %v912
    %v914 = vrot.slane %v574, %v913
    %v915 = vsel %vm668, %v914, %v910
    %v916 = vlaneseq
    %v917 = vshrl.u32 %v916, 7
    %v918 = vsub.s32 %v670, %v917
    %v919 = vrot.slane %v577, %v918
    %v920 = vsel %vm675, %v919, %v915
    %v921 = vlaneseq
    %v922 = vshrl.u32 %v921, 7
    %v923 = vsub.s32 %v677, %v922
    %v924 = vrot.slane %v580, %v923
    %v925 = vsel %vm682, %v924, %v920
    %v926 = vlaneseq
    %v927 = vshrl.u32 %v926, 7
    %v928 = vsub.s32 %v684, %v927
    %v929 = vrot.slane %v583, %v928
    %v930 = vsel %vm689, %v929, %v925
    %v931 = vlaneseq
    %v932 = vshrl.u32 %v931, 7
    %v933 = vsub.s32 %v691, %v932
    %v934 = vrot.slane %v586, %v933
    %v935 = vsel %vm696, %v934, %v930
    %vm936 = vcmask 1041409
    %v937 = vsel %vm936, %v731, %v697
    %vm938 = vcmask 1042434
    %v939 = vsel %vm938, %v765, %v937
    %vm940 = vcmask 1043459
    %v941 = vsel %vm940, %v799, %v939
    %vm942 = vcmask 1044484
    %v943 = vsel %vm942, %v833, %v941
    %vm944 = vcmask 1045509
    %v945 = vsel %vm944, %v867, %v943
    %vm946 = vcmask 1046534
    %v947 = vsel %vm946, %v901, %v945
    %vm948 = vcmask 1047559
    %v949 = vsel %vm948, %v935, %v947
    %vm950 = vcmask 408576
    %v951 = vsel %vm950, %v949, 0
    %vm953 = vcmask 1041408
    %v955 = vsel %vm953, %v593, 0
    %957 = vmatprep.subr.mxu0 0.0
    %958 = vmatpush1.msra.mxu0 %v587
    %959 = vmatprep.subr.mxu0 0.0
    %960 = vmatpush1.msra.mxu0 %v588
    %961 = vmatprep.subr.mxu0 0.0
    %962 = vmatpush1.msra.mxu0 %v589
    %963 = vmatprep.subr.mxu0 0.0
    %964 = vmatpush1.msra.mxu0 %v590
    %965 = vmatprep.subr.mxu0 0.0
    %966 = vmatpush1.msra.mxu0 %v591
    %967 = vmatprep.subr.mxu0 0.0
    %968 = vmatpush1.msra.mxu0 %v592
    %969 = vmatprep.subr.mxu0 0.0
    %970 = vmatpush1.msra.mxu0 %v955
    %971 = vmatprep.subr.mxu0 0.0
    %972 = vmatpush1.msra.mxu0 0.0
    %973 = vmatprep.subr.mxu0 0.0
    %974 = vmatpush1.msra.mxu0 0.0
    %975 = vmatprep.subr.mxu0 0.0
    %976 = vmatpush1.msra.mxu0 0.0
    %977 = vmatprep.subr.mxu0 0.0
    %978 = vmatpush1.msra.mxu0 0.0
    %979 = vmatprep.subr.mxu0 0.0
    %980 = vmatpush1.msra.mxu0 0.0
    %981 = vmatprep.subr.mxu0 0.0
    %982 = vmatpush1.msra.mxu0 0.0
    %983 = vmatprep.subr.mxu0 0.0
    %984 = vmatpush1.msra.mxu0 0.0
    %985 = vmatprep.subr.mxu0 0.0
    %986 = vmatpush1.msra.mxu0 0.0
    %987 = vmatprep.subr.mxu0 0.0
    %988 = vmatpush1.msra.mxu0 0.0
    %989 = vmatprep.subr.mxu0 0.0
    %990 = vmatpush1.msra.mxu0 0.0
    %991 = vmatprep.subr.mxu0 0.0
    %992 = vmatpush1.msra.mxu0 0.0
    %993 = vmatprep.subr.mxu0 0.0
    %994 = vmatpush1.msra.mxu0 0.0
    %995 = vmatprep.subr.mxu0 0.0
    %996 = vmatpush1.msra.mxu0 0.0
    %997 = vmatprep.subr.mxu0 0.0
    %998 = vmatpush1.msra.mxu0 0.0
    %999 = vmatprep.subr.mxu0 0.0
    %1000 = vmatpush1.msra.mxu0 0.0
    %1001 = vmatprep.subr.mxu0 0.0
    %1002 = vmatpush1.msra.mxu0 0.0
    %1003 = vmatprep.subr.mxu0 0.0
    %1004 = vmatpush1.msra.mxu0 0.0
    %1005 = vmatprep.subr.mxu0 0.0
    %1006 = vmatpush1.msra.mxu0 0.0
    %1007 = vmatprep.subr.mxu0 0.0
    %1008 = vmatpush1.msra.mxu0 0.0
    %1009 = vmatprep.subr.mxu0 0.0
    %1010 = vmatpush1.msra.mxu0 0.0
    %1011 = vmatprep.subr.mxu0 0.0
    %1012 = vmatpush1.msra.mxu0 0.0
    %1013 = vmatprep.subr.mxu0 0.0
    %1014 = vmatpush1.msra.mxu0 0.0
    %1015 = vmatprep.subr.mxu0 0.0
    %1016 = vmatpush1.msra.mxu0 0.0
    %1017 = vmatprep.subr.mxu0 0.0
    %1018 = vmatpush1.msra.mxu0 0.0
    %1019 = vmatprep.subr.mxu0 0.0
    %1020 = vmatpush1.msra.mxu0 0.0
    %1021 = vmatprep.mubr.f32.mxu0 0.0
    %1022 = vmatmul.mubr.f32.gmra.mrb[0].mxu0 %v951
    %v1023 = vpop.f32.mrb[0].mxu0
    %v1024 = vadd.f32 0.0, %v1023
    %v1025 = vpop.f32.mrb[0].mxu0
    %1026 = vdwg.mxu0
    %v1027 = vld [vmem:[#allocation5] sm:$0xff]
    %v1028 = vcombine.high %v1027, %v1027
    %v1030 = vunpack.c.l.s4 1966171168
    %v1031 = vunpack.c.0.s8 %v1030
    %v1032 = vlaneseq
    %v1033 = vshrl.u32 %v1032, 7
    %v1034 = vsub.s32 %v1031, %v1033
    %v1035 = vrot.slane %v1027, %v1034
    %v1037 = vunpack.c.l.s4 1966171168
    %v1038 = vunpack.c.0.s8 %v1037
    %v1039 = vlaneseq
    %v1040 = vshrl.u32 %v1039, 7
    %v1041 = vsub.s32 %v1038, %v1040
    %v1042 = vrot.slane %v1028, %v1041
    %v1043 = vcombine.high %v1035, %v1035
    %v1044 = vcombine.high %v1042, %v1042
    %v1046 = vunpack.c.l.s4 1966171168
    %v1047 = vunpack.c.0.s8 %v1046
    %v1048 = vlaneseq
    %v1049 = vshrl.u32 %v1048, 7
    %v1050 = vsub.s32 %v1047, %v1049
    %v1051 = vrot.slane %v1035, %v1050
    %v1053 = vunpack.c.l.s4 1966171168
    %v1054 = vunpack.c.0.s8 %v1053
    %v1055 = vlaneseq
    %v1056 = vshrl.u32 %v1055, 7
    %v1057 = vsub.s32 %v1054, %v1056
    %v1058 = vrot.slane %v1042, %v1057
    %v1060 = vunpack.c.l.s4 1966171168
    %v1061 = vunpack.c.0.s8 %v1060
    %v1062 = vlaneseq
    %v1063 = vshrl.u32 %v1062, 7
    %v1064 = vsub.s32 %v1061, %v1063
    %v1065 = vrot.slane %v1043, %v1064
    %v1067 = vunpack.c.l.s4 1966171168
    %v1068 = vunpack.c.0.s8 %v1067
    %v1069 = vlaneseq
    %v1070 = vshrl.u32 %v1069, 7
    %v1071 = vsub.s32 %v1068, %v1070
    %v1072 = vrot.slane %v1044, %v1071
    %v1073 = vcombine.high %v1051, %v1051
    %v1074 = vcombine.high %v1058, %v1058
    %v1075 = vcombine.high %v1065, %v1065
    %v1076 = vcombine.high %v1072, %v1072
    %v1077 = vlaneseq
    %v1078 = vshrl.u32 %v1077, 7
    %v1079 = vsub.s32 0, %v1078
    %v1080 = vrot.slane %v1051, %v1079
    %v1081 = vlaneseq
    %v1082 = vshrl.u32 %v1081, 7
    %v1083 = vsub.s32 0, %v1082
    %v1084 = vrot.slane %v1065, %v1083
    %v1085 = vlaneseq
    %v1086 = vshrl.u32 %v1085, 7
    %v1087 = vsub.s32 0, %v1086
    %v1088 = vrot.slane %v1073, %v1087
    %v1089 = vlaneseq
    %v1090 = vshrl.u32 %v1089, 7
    %v1091 = vsub.s32 0, %v1090
    %v1092 = vrot.slane %v1075, %v1091
    %v1093 = vlaneseq
    %v1094 = vshrl.u32 %v1093, 7
    %v1095 = vsub.s32 0, %v1094
    %v1096 = vrot.slane %v1058, %v1095
    %v1097 = vlaneseq
    %v1098 = vshrl.u32 %v1097, 7
    %v1099 = vsub.s32 0, %v1098
    %v1100 = vrot.slane %v1072, %v1099
    %v1101 = vlaneseq
    %v1102 = vshrl.u32 %v1101, 7
    %v1103 = vsub.s32 0, %v1102
    %v1104 = vrot.slane %v1074, %v1103
    %v1105 = vlaneseq
    %v1106 = vshrl.u32 %v1105, 7
    %v1107 = vsub.s32 0, %v1106
    %v1108 = vrot.slane %v1076, %v1107
    %vm1109 = vcmp.eq.s32.totalorder %v1080, %v127
    %vm1110 = vcmp.eq.s32.totalorder %v1080, %v128
    %vm1111 = vcmp.eq.s32.totalorder %v1080, %v129
    %vm1112 = vcmp.eq.s32.totalorder %v1080, %v130
    %vm1113 = vcmp.eq.s32.totalorder %v1084, %v127
    %vm1114 = vcmp.eq.s32.totalorder %v1084, %v128
    %vm1115 = vcmp.eq.s32.totalorder %v1084, %v129
    %vm1116 = vcmp.eq.s32.totalorder %v1084, %v130
    %vm1117 = vcmp.eq.s32.totalorder %v1088, %v127
    %vm1118 = vcmp.eq.s32.totalorder %v1088, %v128
    %vm1119 = vcmp.eq.s32.totalorder %v1088, %v129
    %vm1120 = vcmp.eq.s32.totalorder %v1088, %v130
    %vm1121 = vcmp.eq.s32.totalorder %v1092, %v127
    %vm1122 = vcmp.eq.s32.totalorder %v1092, %v128
    %vm1123 = vcmp.eq.s32.totalorder %v1092, %v129
    %vm1124 = vcmp.eq.s32.totalorder %v1092, %v130
    %vm1125 = vcmp.eq.s32.totalorder %v1096, %v127
    %vm1126 = vcmp.eq.s32.totalorder %v1096, %v128
    %vm1127 = vcmp.eq.s32.totalorder %v1096, %v129
    %vm1128 = vcmp.eq.s32.totalorder %v1096, %v130
    %vm1129 = vcmp.eq.s32.totalorder %v1100, %v127
    %vm1130 = vcmp.eq.s32.totalorder %v1100, %v128
    %vm1131 = vcmp.eq.s32.totalorder %v1100, %v129
    %vm1132 = vcmp.eq.s32.totalorder %v1100, %v130
    %vm1133 = vcmp.eq.s32.totalorder %v1104, %v127
    %vm1134 = vcmp.eq.s32.totalorder %v1104, %v128
    %vm1135 = vcmp.eq.s32.totalorder %v1104, %v129
    %vm1136 = vcmp.eq.s32.totalorder %v1104, %v130
    %vm1137 = vcmp.eq.s32.totalorder %v1108, %v127
    %vm1138 = vcmp.eq.s32.totalorder %v1108, %v128
    %vm1139 = vcmp.eq.s32.totalorder %v1108, %v129
    %vm1140 = vcmp.eq.s32.totalorder %v1108, %v130
    %v1141 = vsel %vm1109, %v324, 0.0
    %v1142 = vsel %vm1110, %v324, 0.0
    %v1143 = vsel %vm1111, %v324, 0.0
    %v1144 = vsel %vm1112, %v324, 0.0
    %v1145 = vsel %vm1113, %v328, 0.0
    %v1146 = vsel %vm1114, %v328, 0.0
    %v1147 = vsel %vm1115, %v328, 0.0
    %v1148 = vsel %vm1116, %v328, 0.0
    %v1149 = vsel %vm1117, %v332, 0.0
    %v1150 = vsel %vm1118, %v332, 0.0
    %v1151 = vsel %vm1119, %v332, 0.0
    %v1152 = vsel %vm1120, %v332, 0.0
    %v1153 = vsel %vm1121, %v336, 0.0
    %v1154 = vsel %vm1122, %v336, 0.0
    %v1155 = vsel %vm1123, %v336, 0.0
    %v1156 = vsel %vm1124, %v336, 0.0
    %v1157 = vsel %vm1125, %v340, 0.0
    %v1158 = vsel %vm1126, %v340, 0.0
    %v1159 = vsel %vm1127, %v340, 0.0
    %v1160 = vsel %vm1128, %v340, 0.0
    %v1161 = vsel %vm1129, %v344, 0.0
    %v1162 = vsel %vm1130, %v344, 0.0
    %v1163 = vsel %vm1131, %v344, 0.0
    %v1164 = vsel %vm1132, %v344, 0.0
    %v1165 = vsel %vm1133, %v348, 0.0
    %v1166 = vsel %vm1134, %v348, 0.0
    %v1167 = vsel %vm1135, %v348, 0.0
    %v1168 = vsel %vm1136, %v348, 0.0
    %v1169 = vsel %vm1137, %v352, 0.0
    %v1170 = vsel %vm1138, %v352, 0.0
    %v1171 = vsel %vm1139, %v352, 0.0
    %v1172 = vsel %vm1140, %v352, 0.0
    %v1173 = vsel %vm417, %v1141, 0.0
    %1174 = vadd.xlane.f32.xlu0 %v1173
    %v1175 = vpop.xlane.xlu0 %1174
    %v1176 = vsel %vm417, %v1142, 0.0
    %1177 = vadd.xlane.f32.xlu0 %v1176
    %v1178 = vpop.xlane.xlu0 %1177
    %v1179 = vsel %vm417, %v1143, 0.0
    %1180 = vadd.xlane.f32.xlu0 %v1179
    %v1181 = vpop.xlane.xlu0 %1180
    %vm1182 = vcmask 62464
    %v1183 = vsel %vm1182, %v1144, 0.0
    %1184 = vadd.xlane.f32.xlu0 %v1183
    %v1185 = vpop.xlane.xlu0 %1184
    %v1186 = vsel %vm417, %v1145, 0.0
    %1187 = vadd.xlane.f32.xlu0 %v1186
    %v1188 = vpop.xlane.xlu0 %1187
    %v1189 = vsel %vm417, %v1146, 0.0
    %1190 = vadd.xlane.f32.xlu0 %v1189
    %v1191 = vpop.xlane.xlu0 %1190
    %v1192 = vsel %vm417, %v1147, 0.0
    %1193 = vadd.xlane.f32.xlu0 %v1192
    %v1194 = vpop.xlane.xlu0 %1193
    %v1195 = vsel %vm1182, %v1148, 0.0
    %1196 = vadd.xlane.f32.xlu0 %v1195
    %v1197 = vpop.xlane.xlu0 %1196
    %v1198 = vsel %vm417, %v1149, 0.0
    %1199 = vadd.xlane.f32.xlu0 %v1198
    %v1200 = vpop.xlane.xlu0 %1199
    %v1201 = vsel %vm417, %v1150, 0.0
    %1202 = vadd.xlane.f32.xlu0 %v1201
    %v1203 = vpop.xlane.xlu0 %1202
    %v1204 = vsel %vm417, %v1151, 0.0
    %1205 = vadd.xlane.f32.xlu0 %v1204
    %v1206 = vpop.xlane.xlu0 %1205
    %v1207 = vsel %vm1182, %v1152, 0.0
    %1208 = vadd.xlane.f32.xlu0 %v1207
    %v1209 = vpop.xlane.xlu0 %1208
    %v1210 = vsel %vm417, %v1153, 0.0
    %1211 = vadd.xlane.f32.xlu0 %v1210
    %v1212 = vpop.xlane.xlu0 %1211
    %v1213 = vsel %vm417, %v1154, 0.0
    %1214 = vadd.xlane.f32.xlu0 %v1213
    %v1215 = vpop.xlane.xlu0 %1214
    %v1216 = vsel %vm417, %v1155, 0.0
    %1217 = vadd.xlane.f32.xlu0 %v1216
    %v1218 = vpop.xlane.xlu0 %1217
    %v1219 = vsel %vm1182, %v1156, 0.0
    %1220 = vadd.xlane.f32.xlu0 %v1219
    %v1221 = vpop.xlane.xlu0 %1220
    %v1222 = vsel %vm417, %v1157, 0.0
    %1223 = vadd.xlane.f32.xlu0 %v1222
    %v1224 = vpop.xlane.xlu0 %1223
    %v1225 = vsel %vm417, %v1158, 0.0
    %1226 = vadd.xlane.f32.xlu0 %v1225
    %v1227 = vpop.xlane.xlu0 %1226
    %v1228 = vsel %vm417, %v1159, 0.0
    %1229 = vadd.xlane.f32.xlu0 %v1228
    %v1230 = vpop.xlane.xlu0 %1229
    %v1231 = vsel %vm1182, %v1160, 0.0
    %1232 = vadd.xlane.f32.xlu0 %v1231
    %v1233 = vpop.xlane.xlu0 %1232
    %v1234 = vsel %vm417, %v1161, 0.0
    %1235 = vadd.xlane.f32.xlu0 %v1234
    %v1236 = vpop.xlane.xlu0 %1235
    %v1237 = vsel %vm417, %v1162, 0.0
    %1238 = vadd.xlane.f32.xlu0 %v1237
    %v1239 = vpop.xlane.xlu0 %1238
    %v1240 = vsel %vm417, %v1163, 0.0
    %1241 = vadd.xlane.f32.xlu0 %v1240
    %v1242 = vpop.xlane.xlu0 %1241
    %v1243 = vsel %vm1182, %v1164, 0.0
    %1244 = vadd.xlane.f32.xlu0 %v1243
    %v1245 = vpop.xlane.xlu0 %1244
    %v1246 = vsel %vm417, %v1165, 0.0
    %1247 = vadd.xlane.f32.xlu0 %v1246
    %v1248 = vpop.xlane.xlu0 %1247
    %v1249 = vsel %vm417, %v1166, 0.0
    %1250 = vadd.xlane.f32.xlu0 %v1249
    %v1251 = vpop.xlane.xlu0 %1250
    %v1252 = vsel %vm417, %v1167, 0.0
    %1253 = vadd.xlane.f32.xlu0 %v1252
    %v1254 = vpop.xlane.xlu0 %1253
    %v1255 = vsel %vm1182, %v1168, 0.0
    %1256 = vadd.xlane.f32.xlu0 %v1255
    %v1257 = vpop.xlane.xlu0 %1256
    %v1258 = vsel %vm417, %v1169, 0.0
    %1259 = vadd.xlane.f32.xlu0 %v1258
    %v1260 = vpop.xlane.xlu0 %1259
    %v1261 = vsel %vm417, %v1170, 0.0
    %1262 = vadd.xlane.f32.xlu0 %v1261
    %v1263 = vpop.xlane.xlu0 %1262
    %v1264 = vsel %vm417, %v1171, 0.0
    %1265 = vadd.xlane.f32.xlu0 %v1264
    %v1266 = vpop.xlane.xlu0 %1265
    %v1267 = vsel %vm1182, %v1172, 0.0
    %1268 = vadd.xlane.f32.xlu0 %v1267
    %v1269 = vpop.xlane.xlu0 %1268
    %v1270 = vld [vmem:[#allocation10] sm:$0xff]
    %v1271 = vld [vmem:[#allocation10 + $0x8] sm:$0xff]
    %v1272 = vld [vmem:[#allocation10 + $0x10] sm:$0xff]
    %v1273 = vld [vmem:[#allocation10 + $0x18] sm:$0x3f]
    %v1306 = vlaneseq
    %v1307 = vshrl.u32 %v1306, 7
    %v1308 = vsub.s32 %v651, %v1307
    %v1309 = vrot.slane %v1175, %v1308
    %v1310 = vlaneseq
    %v1311 = vshrl.u32 %v1310, 7
    %v1312 = vsub.s32 %v656, %v1311
    %v1313 = vrot.slane %v1178, %v1312
    %v1314 = vsel %vm661, %v1313, %v1309
    %v1315 = vlaneseq
    %v1316 = vshrl.u32 %v1315, 7
    %v1317 = vsub.s32 %v663, %v1316
    %v1318 = vrot.slane %v1181, %v1317
    %v1319 = vsel %vm668, %v1318, %v1314
    %v1320 = vlaneseq
    %v1321 = vshrl.u32 %v1320, 7
    %v1322 = vsub.s32 %v670, %v1321
    %v1323 = vrot.slane %v1185, %v1322
    %v1324 = vsel %vm675, %v1323, %v1319
    %v1325 = vlaneseq
    %v1326 = vshrl.u32 %v1325, 7
    %v1327 = vsub.s32 %v651, %v1326
    %v1328 = vrot.slane %v1188, %v1327
    %v1329 = vlaneseq
    %v1330 = vshrl.u32 %v1329, 7
    %v1331 = vsub.s32 %v656, %v1330
    %v1332 = vrot.slane %v1191, %v1331
    %v1333 = vsel %vm661, %v1332, %v1328
    %v1334 = vlaneseq
    %v1335 = vshrl.u32 %v1334, 7
    %v1336 = vsub.s32 %v663, %v1335
    %v1337 = vrot.slane %v1194, %v1336
    %v1338 = vsel %vm668, %v1337, %v1333
    %v1339 = vlaneseq
    %v1340 = vshrl.u32 %v1339, 7
    %v1341 = vsub.s32 %v670, %v1340
    %v1342 = vrot.slane %v1197, %v1341
    %v1343 = vsel %vm675, %v1342, %v1338
    %v1344 = vlaneseq
    %v1345 = vshrl.u32 %v1344, 7
    %v1346 = vsub.s32 %v651, %v1345
    %v1347 = vrot.slane %v1200, %v1346
    %v1348 = vlaneseq
    %v1349 = vshrl.u32 %v1348, 7
    %v1350 = vsub.s32 %v656, %v1349
    %v1351 = vrot.slane %v1203, %v1350
    %v1352 = vsel %vm661, %v1351, %v1347
    %v1353 = vlaneseq
    %v1354 = vshrl.u32 %v1353, 7
    %v1355 = vsub.s32 %v663, %v1354
    %v1356 = vrot.slane %v1206, %v1355
    %v1357 = vsel %vm668, %v1356, %v1352
    %v1358 = vlaneseq
    %v1359 = vshrl.u32 %v1358, 7
    %v1360 = vsub.s32 %v670, %v1359
    %v1361 = vrot.slane %v1209, %v1360
    %v1362 = vsel %vm675, %v1361, %v1357
    %v1363 = vlaneseq
    %v1364 = vshrl.u32 %v1363, 7
    %v1365 = vsub.s32 %v651, %v1364
    %v1366 = vrot.slane %v1212, %v1365
    %v1367 = vlaneseq
    %v1368 = vshrl.u32 %v1367, 7
    %v1369 = vsub.s32 %v656, %v1368
    %v1370 = vrot.slane %v1215, %v1369
    %v1371 = vsel %vm661, %v1370, %v1366
    %v1372 = vlaneseq
    %v1373 = vshrl.u32 %v1372, 7
    %v1374 = vsub.s32 %v663, %v1373
    %v1375 = vrot.slane %v1218, %v1374
    %v1376 = vsel %vm668, %v1375, %v1371
    %v1377 = vlaneseq
    %v1378 = vshrl.u32 %v1377, 7
    %v1379 = vsub.s32 %v670, %v1378
    %v1380 = vrot.slane %v1221, %v1379
    %v1381 = vsel %vm675, %v1380, %v1376
    %v1382 = vlaneseq
    %v1383 = vshrl.u32 %v1382, 7
    %v1384 = vsub.s32 %v651, %v1383
    %v1385 = vrot.slane %v1224, %v1384
    %v1386 = vlaneseq
    %v1387 = vshrl.u32 %v1386, 7
    %v1388 = vsub.s32 %v656, %v1387
    %v1389 = vrot.slane %v1227, %v1388
    %v1390 = vsel %vm661, %v1389, %v1385
    %v1391 = vlaneseq
    %v1392 = vshrl.u32 %v1391, 7
    %v1393 = vsub.s32 %v663, %v1392
    %v1394 = vrot.slane %v1230, %v1393
    %v1395 = vsel %vm668, %v1394, %v1390
    %v1396 = vlaneseq
    %v1397 = vshrl.u32 %v1396, 7
    %v1398 = vsub.s32 %v670, %v1397
    %v1399 = vrot.slane %v1233, %v1398
    %v1400 = vsel %vm675, %v1399, %v1395
    %v1401 = vlaneseq
    %v1402 = vshrl.u32 %v1401, 7
    %v1403 = vsub.s32 %v651, %v1402
    %v1404 = vrot.slane %v1236, %v1403
    %v1405 = vlaneseq
    %v1406 = vshrl.u32 %v1405, 7
    %v1407 = vsub.s32 %v656, %v1406
    %v1408 = vrot.slane %v1239, %v1407
    %v1409 = vsel %vm661, %v1408, %v1404
    %v1410 = vlaneseq
    %v1411 = vshrl.u32 %v1410, 7
    %v1412 = vsub.s32 %v663, %v1411
    %v1413 = vrot.slane %v1242, %v1412
    %v1414 = vsel %vm668, %v1413, %v1409
    %v1415 = vlaneseq
    %v1416 = vshrl.u32 %v1415, 7
    %v1417 = vsub.s32 %v670, %v1416
    %v1418 = vrot.slane %v1245, %v1417
    %v1419 = vsel %vm675, %v1418, %v1414
    %v1420 = vlaneseq
    %v1421 = vshrl.u32 %v1420, 7
    %v1422 = vsub.s32 %v651, %v1421
    %v1423 = vrot.slane %v1248, %v1422
    %v1424 = vlaneseq
    %v1425 = vshrl.u32 %v1424, 7
    %v1426 = vsub.s32 %v656, %v1425
    %v1427 = vrot.slane %v1251, %v1426
    %v1428 = vsel %vm661, %v1427, %v1423
    %v1429 = vlaneseq
    %v1430 = vshrl.u32 %v1429, 7
    %v1431 = vsub.s32 %v663, %v1430
    %v1432 = vrot.slane %v1254, %v1431
    %v1433 = vsel %vm668, %v1432, %v1428
    %v1434 = vlaneseq
    %v1435 = vshrl.u32 %v1434, 7
    %v1436 = vsub.s32 %v670, %v1435
    %v1437 = vrot.slane %v1257, %v1436
    %v1438 = vsel %vm675, %v1437, %v1433
    %v1439 = vlaneseq
    %v1440 = vshrl.u32 %v1439, 7
    %v1441 = vsub.s32 %v651, %v1440
    %v1442 = vrot.slane %v1260, %v1441
    %v1443 = vlaneseq
    %v1444 = vshrl.u32 %v1443, 7
    %v1445 = vsub.s32 %v656, %v1444
    %v1446 = vrot.slane %v1263, %v1445
    %v1447 = vsel %vm661, %v1446, %v1442
    %v1448 = vlaneseq
    %v1449 = vshrl.u32 %v1448, 7
    %v1450 = vsub.s32 %v663, %v1449
    %v1451 = vrot.slane %v1266, %v1450
    %v1452 = vsel %vm668, %v1451, %v1447
    %v1453 = vlaneseq
    %v1454 = vshrl.u32 %v1453, 7
    %v1455 = vsub.s32 %v670, %v1454
    %v1456 = vrot.slane %v1269, %v1455
    %v1457 = vsel %vm675, %v1456, %v1452
    %v1458 = vsel %vm936, %v1343, %v1324
    %v1459 = vsel %vm938, %v1362, %v1458
    %v1460 = vsel %vm940, %v1381, %v1459
    %v1461 = vsel %vm942, %v1400, %v1460
    %v1462 = vsel %vm944, %v1419, %v1461
    %v1463 = vsel %vm946, %v1438, %v1462
    %v1464 = vsel %vm948, %v1457, %v1463
    %vm1465 = vcmask 244736
    %v1466 = vsel %vm1465, %v1464, 0
    %vm1468 = vcmask 1045504
    %v1470 = vsel %vm1468, %v1273, 0
    %1472 = vmatprep.subr.mxu0 0.0
    %1473 = vmatpush1.msra.mxu0 %v1270
    %1474 = vmatprep.subr.mxu0 0.0
    %1475 = vmatpush1.msra.mxu0 %v1271
    %1476 = vmatprep.subr.mxu0 0.0
    %1477 = vmatpush1.msra.mxu0 %v1272
    %1478 = vmatprep.subr.mxu0 0.0
    %1479 = vmatpush1.msra.mxu0 %v1470
    %1480 = vmatprep.subr.mxu0 0.0
    %1481 = vmatpush1.msra.mxu0 0.0
    %1482 = vmatprep.subr.mxu0 0.0
    %1483 = vmatpush1.msra.mxu0 0.0
    %1484 = vmatprep.subr.mxu0 0.0
    %1485 = vmatpush1.msra.mxu0 0.0
    %1486 = vmatprep.subr.mxu0 0.0
    %1487 = vmatpush1.msra.mxu0 0.0
    %1488 = vmatprep.subr.mxu0 0.0
    %1489 = vmatpush1.msra.mxu0 0.0
    %1490 = vmatprep.subr.mxu0 0.0
    %1491 = vmatpush1.msra.mxu0 0.0
    %1492 = vmatprep.subr.mxu0 0.0
    %1493 = vmatpush1.msra.mxu0 0.0
    %1494 = vmatprep.subr.mxu0 0.0
    %1495 = vmatpush1.msra.mxu0 0.0
    %1496 = vmatprep.subr.mxu0 0.0
    %1497 = vmatpush1.msra.mxu0 0.0
    %1498 = vmatprep.subr.mxu0 0.0
    %1499 = vmatpush1.msra.mxu0 0.0
    %1500 = vmatprep.subr.mxu0 0.0
    %1501 = vmatpush1.msra.mxu0 0.0
    %1502 = vmatprep.subr.mxu0 0.0
    %1503 = vmatpush1.msra.mxu0 0.0
    %1504 = vmatprep.subr.mxu0 0.0
    %1505 = vmatpush1.msra.mxu0 0.0
    %1506 = vmatprep.subr.mxu0 0.0
    %1507 = vmatpush1.msra.mxu0 0.0
    %1508 = vmatprep.subr.mxu0 0.0
    %1509 = vmatpush1.msra.mxu0 0.0
    %1510 = vmatprep.subr.mxu0 0.0
    %1511 = vmatpush1.msra.mxu0 0.0
    %1512 = vmatprep.subr.mxu0 0.0
    %1513 = vmatpush1.msra.mxu0 0.0
    %1514 = vmatprep.subr.mxu0 0.0
    %1515 = vmatpush1.msra.mxu0 0.0
    %1516 = vmatprep.subr.mxu0 0.0
    %1517 = vmatpush1.msra.mxu0 0.0
    %1518 = vmatprep.subr.mxu0 0.0
    %1519 = vmatpush1.msra.mxu0 0.0
    %1520 = vmatprep.subr.mxu0 0.0
    %1521 = vmatpush1.msra.mxu0 0.0
    %1522 = vmatprep.subr.mxu0 0.0
    %1523 = vmatpush1.msra.mxu0 0.0
    %1524 = vmatprep.subr.mxu0 0.0
    %1525 = vmatpush1.msra.mxu0 0.0
    %1526 = vmatprep.subr.mxu0 0.0
    %1527 = vmatpush1.msra.mxu0 0.0
    %1528 = vmatprep.subr.mxu0 0.0
    %1529 = vmatpush1.msra.mxu0 0.0
    %1530 = vmatprep.subr.mxu0 0.0
    %1531 = vmatpush1.msra.mxu0 0.0
    %1532 = vmatprep.subr.mxu0 0.0
    %1533 = vmatpush1.msra.mxu0 0.0
    %1534 = vmatprep.subr.mxu0 0.0
    %1535 = vmatpush1.msra.mxu0 0.0
    %1536 = vmatprep.mubr.f32.mxu0 0.0
    %1537 = vmatmul.mubr.f32.gmra.mrb[0].mxu0 %v1466
    %v1538 = vpop.f32.mrb[0].mxu0
    %v1539 = vadd.f32 0.0, %v1538
    %v1540 = vpop.f32.mrb[0].mxu0
    %1541 = vdwg.mxu0
    %vm1542 = vcmask 130048
    %v1544 = vsel %vm1542, %v1539, 0
    %1546 = vmatprep.subr.mxu0 0.0
    %1547 = vmatpush1.msra.mxu0 %v121
    %1548 = vmatprep.subr.mxu0 0.0
    %1549 = vmatpush1.msra.mxu0 %v122
    %1550 = vmatprep.subr.mxu0 0.0
    %1551 = vmatpush1.msra.mxu0 0.0
    %1552 = vmatprep.subr.mxu0 0.0
    %1553 = vmatpush1.msra.mxu0 0.0
    %1554 = vmatprep.subr.mxu0 0.0
    %1555 = vmatpush1.msra.mxu0 0.0
    %1556 = vmatprep.subr.mxu0 0.0
    %1557 = vmatpush1.msra.mxu0 0.0
    %1558 = vmatprep.subr.mxu0 0.0
    %1559 = vmatpush1.msra.mxu0 0.0
    %1560 = vmatprep.subr.mxu0 0.0
    %1561 = vmatpush1.msra.mxu0 0.0
    %1562 = vmatprep.subr.mxu0 0.0
    %1563 = vmatpush1.msra.mxu0 0.0
    %1564 = vmatprep.subr.mxu0 0.0
    %1565 = vmatpush1.msra.mxu0 0.0
    %1566 = vmatprep.subr.mxu0 0.0
    %1567 = vmatpush1.msra.mxu0 0.0
    %1568 = vmatprep.subr.mxu0 0.0
    %1569 = vmatpush1.msra.mxu0 0.0
    %1570 = vmatprep.subr.mxu0 0.0
    %1571 = vmatpush1.msra.mxu0 0.0
    %1572 = vmatprep.subr.mxu0 0.0
    %1573 = vmatpush1.msra.mxu0 0.0
    %1574 = vmatprep.subr.mxu0 0.0
    %1575 = vmatpush1.msra.mxu0 0.0
    %1576 = vmatprep.subr.mxu0 0.0
    %1577 = vmatpush1.msra.mxu0 0.0
    %1578 = vmatprep.subr.mxu0 0.0
    %1579 = vmatpush1.msra.mxu0 0.0
    %1580 = vmatprep.subr.mxu0 0.0
    %1581 = vmatpush1.msra.mxu0 0.0
    %1582 = vmatprep.subr.mxu0 0.0
    %1583 = vmatpush1.msra.mxu0 0.0
    %1584 = vmatprep.subr.mxu0 0.0
    %1585 = vmatpush1.msra.mxu0 0.0
    %1586 = vmatprep.subr.mxu0 0.0
    %1587 = vmatpush1.msra.mxu0 0.0
    %1588 = vmatprep.subr.mxu0 0.0
    %1589 = vmatpush1.msra.mxu0 0.0
    %1590 = vmatprep.subr.mxu0 0.0
    %1591 = vmatpush1.msra.mxu0 0.0
    %1592 = vmatprep.subr.mxu0 0.0
    %1593 = vmatpush1.msra.mxu0 0.0
    %1594 = vmatprep.subr.mxu0 0.0
    %1595 = vmatpush1.msra.mxu0 0.0
    %1596 = vmatprep.subr.mxu0 0.0
    %1597 = vmatpush1.msra.mxu0 0.0
    %1598 = vmatprep.subr.mxu0 0.0
    %1599 = vmatpush1.msra.mxu0 0.0
    %1600 = vmatprep.subr.mxu0 0.0
    %1601 = vmatpush1.msra.mxu0 0.0
    %1602 = vmatprep.subr.mxu0 0.0
    %1603 = vmatpush1.msra.mxu0 0.0
    %1604 = vmatprep.subr.mxu0 0.0
    %1605 = vmatpush1.msra.mxu0 0.0
    %1606 = vmatprep.subr.mxu0 0.0
    %1607 = vmatpush1.msra.mxu0 0.0
    %1608 = vmatprep.subr.mxu0 0.0
    %1609 = vmatpush1.msra.mxu0 0.0
    %1610 = vmatprep.mubr.f32.mxu0 0.0
    %1611 = vmatmul.mubr.f32.gmra.mrb[0].mxu0 %v1544
    %v1612 = vpop.f32.mrb[0].mxu0
    %v1613 = vadd.f32 0.0, %v1612
    %v1614 = vpop.f32.mrb[0].mxu0
    %1615 = vdwg.mxu0
    %vm1616 = vcmask 261120
    %v1618 = vsel %vm1616, %v1024, 0
    %1620 = vmatprep.subr.mxu0 0.0
    %1621 = vmatpush1.msra.mxu0 %v117
    %1622 = vmatprep.subr.mxu0 0.0
    %1623 = vmatpush1.msra.mxu0 %v118
    %1624 = vmatprep.subr.mxu0 0.0
    %1625 = vmatpush1.msra.mxu0 %v119
    %1626 = vmatprep.subr.mxu0 0.0
    %1627 = vmatpush1.msra.mxu0 %v120
    %1628 = vmatprep.subr.mxu0 0.0
    %1629 = vmatpush1.msra.mxu0 0.0
    %1630 = vmatprep.subr.mxu0 0.0
    %1631 = vmatpush1.msra.mxu0 0.0
    %1632 = vmatprep.subr.mxu0 0.0
    %1633 = vmatpush1.msra.mxu0 0.0
    %1634 = vmatprep.subr.mxu0 0.0
    %1635 = vmatpush1.msra.mxu0 0.0
    %1636 = vmatprep.subr.mxu0 0.0
    %1637 = vmatpush1.msra.mxu0 0.0
    %1638 = vmatprep.subr.mxu0 0.0
    %1639 = vmatpush1.msra.mxu0 0.0
    %1640 = vmatprep.subr.mxu0 0.0
    %1641 = vmatpush1.msra.mxu0 0.0
    %1642 = vmatprep.subr.mxu0 0.0
    %1643 = vmatpush1.msra.mxu0 0.0
    %1644 = vmatprep.subr.mxu0 0.0
    %1645 = vmatpush1.msra.mxu0 0.0
    %1646 = vmatprep.subr.mxu0 0.0
    %1647 = vmatpush1.msra.mxu0 0.0
    %1648 = vmatprep.subr.mxu0 0.0
    %1649 = vmatpush1.msra.mxu0 0.0
    %1650 = vmatprep.subr.mxu0 0.0
    %1651 = vmatpush1.msra.mxu0 0.0
    %1652 = vmatprep.subr.mxu0 0.0
    %1653 = vmatpush1.msra.mxu0 0.0
    %1654 = vmatprep.subr.mxu0 0.0
    %1655 = vmatpush1.msra.mxu0 0.0
    %1656 = vmatprep.subr.mxu0 0.0
    %1657 = vmatpush1.msra.mxu0 0.0
    %1658 = vmatprep.subr.mxu0 0.0
    %1659 = vmatpush1.msra.mxu0 0.0
    %1660 = vmatprep.subr.mxu0 0.0
    %1661 = vmatpush1.msra.mxu0 0.0
    %1662 = vmatprep.subr.mxu0 0.0
    %1663 = vmatpush1.msra.mxu0 0.0
    %1664 = vmatprep.subr.mxu0 0.0
    %1665 = vmatpush1.msra.mxu0 0.0
    %1666 = vmatprep.subr.mxu0 0.0
    %1667 = vmatpush1.msra.mxu0 0.0
    %1668 = vmatprep.subr.mxu0 0.0
    %1669 = vmatpush1.msra.mxu0 0.0
    %1670 = vmatprep.subr.mxu0 0.0
    %1671 = vmatpush1.msra.mxu0 0.0
    %1672 = vmatprep.subr.mxu0 0.0
    %1673 = vmatpush1.msra.mxu0 0.0
    %1674 = vmatprep.subr.mxu0 0.0
    %1675 = vmatpush1.msra.mxu0 0.0
    %1676 = vmatprep.subr.mxu0 0.0
    %1677 = vmatpush1.msra.mxu0 0.0
    %1678 = vmatprep.subr.mxu0 0.0
    %1679 = vmatpush1.msra.mxu0 0.0
    %1680 = vmatprep.subr.mxu0 0.0
    %1681 = vmatpush1.msra.mxu0 0.0
    %1682 = vmatprep.subr.mxu0 0.0
    %1683 = vmatpush1.msra.mxu0 0.0
    %1684 = vmatprep.mubr.f32.mxu0 0.0
    %1685 = vmatmul.mubr.f32.gmra.mrb[0].mxu0 %v1618
    %v1686 = vpop.f32.mrb[0].mxu0
    %v1687 = vadd.f32 %v1613, %v1686
    %v1688 = vpop.f32.mrb[0].mxu0
    %1689 = vdwg.mxu0
    %s1690 = scalar_lea.vmem [#allocation5], 8
    %v1691 = vld [vmem:[%s1690] sm:$0xff]
    %v1692 = vcombine.high %v1691, %v1691
    %v1694 = vunpack.c.l.s4 1966171168
    %v1695 = vunpack.c.0.s8 %v1694
    %v1696 = vlaneseq
    %v1697 = vshrl.u32 %v1696, 7
    %v1698 = vsub.s32 %v1695, %v1697
    %v1699 = vrot.slane %v1691, %v1698
    %v1701 = vunpack.c.l.s4 1966171168
    %v1702 = vunpack.c.0.s8 %v1701
    %v1703 = vlaneseq
    %v1704 = vshrl.u32 %v1703, 7
    %v1705 = vsub.s32 %v1702, %v1704
    %v1706 = vrot.slane %v1692, %v1705
    %v1707 = vcombine.high %v1699, %v1699
    %v1708 = vcombine.high %v1706, %v1706
    %v1710 = vunpack.c.l.s4 1966171168
    %v1711 = vunpack.c.0.s8 %v1710
    %v1712 = vlaneseq
    %v1713 = vshrl.u32 %v1712, 7
    %v1714 = vsub.s32 %v1711, %v1713
    %v1715 = vrot.slane %v1699, %v1714
    %v1717 = vunpack.c.l.s4 1966171168
    %v1718 = vunpack.c.0.s8 %v1717
    %v1719 = vlaneseq
    %v1720 = vshrl.u32 %v1719, 7
    %v1721 = vsub.s32 %v1718, %v1720
    %v1722 = vrot.slane %v1706, %v1721
    %v1724 = vunpack.c.l.s4 1966171168
    %v1725 = vunpack.c.0.s8 %v1724
    %v1726 = vlaneseq
    %v1727 = vshrl.u32 %v1726, 7
    %v1728 = vsub.s32 %v1725, %v1727
    %v1729 = vrot.slane %v1707, %v1728
    %v1731 = vunpack.c.l.s4 1966171168
    %v1732 = vunpack.c.0.s8 %v1731
    %v1733 = vlaneseq
    %v1734 = vshrl.u32 %v1733, 7
    %v1735 = vsub.s32 %v1732, %v1734
    %v1736 = vrot.slane %v1708, %v1735
    %v1737 = vcombine.high %v1715, %v1715
    %v1738 = vcombine.high %v1722, %v1722
    %v1739 = vcombine.high %v1729, %v1729
    %v1740 = vcombine.high %v1736, %v1736
    %v1741 = vlaneseq
    %v1742 = vshrl.u32 %v1741, 7
    %v1743 = vsub.s32 0, %v1742
    %v1744 = vrot.slane %v1715, %v1743
    %v1745 = vlaneseq
    %v1746 = vshrl.u32 %v1745, 7
    %v1747 = vsub.s32 0, %v1746
    %v1748 = vrot.slane %v1729, %v1747
    %v1749 = vlaneseq
    %v1750 = vshrl.u32 %v1749, 7
    %v1751 = vsub.s32 0, %v1750
    %v1752 = vrot.slane %v1737, %v1751
    %v1753 = vlaneseq
    %v1754 = vshrl.u32 %v1753, 7
    %v1755 = vsub.s32 0, %v1754
    %v1756 = vrot.slane %v1739, %v1755
    %v1757 = vlaneseq
    %v1758 = vshrl.u32 %v1757, 7
    %v1759 = vsub.s32 0, %v1758
    %v1760 = vrot.slane %v1722, %v1759
    %v1761 = vlaneseq
    %v1762 = vshrl.u32 %v1761, 7
    %v1763 = vsub.s32 0, %v1762
    %v1764 = vrot.slane %v1736, %v1763
    %v1765 = vlaneseq
    %v1766 = vshrl.u32 %v1765, 7
    %v1767 = vsub.s32 0, %v1766
    %v1768 = vrot.slane %v1738, %v1767
    %v1769 = vlaneseq
    %v1770 = vshrl.u32 %v1769, 7
    %v1771 = vsub.s32 0, %v1770
    %v1772 = vrot.slane %v1740, %v1771
    %vm1773 = vcmp.eq.s32.totalorder %v1744, %v127
    %vm1774 = vcmp.eq.s32.totalorder %v1744, %v128
    %vm1775 = vcmp.eq.s32.totalorder %v1744, %v129
    %vm1776 = vcmp.eq.s32.totalorder %v1744, %v130
    %vm1777 = vcmp.eq.s32.totalorder %v1748, %v127
    %vm1778 = vcmp.eq.s32.totalorder %v1748, %v128
    %vm1779 = vcmp.eq.s32.totalorder %v1748, %v129
    %vm1780 = vcmp.eq.s32.totalorder %v1748, %v130
    %vm1781 = vcmp.eq.s32.totalorder %v1752, %v127
    %vm1782 = vcmp.eq.s32.totalorder %v1752, %v128
    %vm1783 = vcmp.eq.s32.totalorder %v1752, %v129
    %vm1784 = vcmp.eq.s32.totalorder %v1752, %v130
    %vm1785 = vcmp.eq.s32.totalorder %v1756, %v127
    %vm1786 = vcmp.eq.s32.totalorder %v1756, %v128
    %vm1787 = vcmp.eq.s32.totalorder %v1756, %v129
    %vm1788 = vcmp.eq.s32.totalorder %v1756, %v130
    %vm1789 = vcmp.eq.s32.totalorder %v1760, %v127
    %vm1790 = vcmp.eq.s32.totalorder %v1760, %v128
    %vm1791 = vcmp.eq.s32.totalorder %v1760, %v129
    %vm1792 = vcmp.eq.s32.totalorder %v1760, %v130
    %vm1793 = vcmp.eq.s32.totalorder %v1764, %v127
    %vm1794 = vcmp.eq.s32.totalorder %v1764, %v128
    %vm1795 = vcmp.eq.s32.totalorder %v1764, %v129
    %vm1796 = vcmp.eq.s32.totalorder %v1764, %v130
    %vm1797 = vcmp.eq.s32.totalorder %v1768, %v127
    %vm1798 = vcmp.eq.s32.totalorder %v1768, %v128
    %vm1799 = vcmp.eq.s32.totalorder %v1768, %v129
    %vm1800 = vcmp.eq.s32.totalorder %v1768, %v130
    %vm1801 = vcmp.eq.s32.totalorder %v1772, %v127
    %vm1802 = vcmp.eq.s32.totalorder %v1772, %v128
    %vm1803 = vcmp.eq.s32.totalorder %v1772, %v129
    %vm1804 = vcmp.eq.s32.totalorder %v1772, %v130
    %v1805 = vsel %vm1773, %v324, 0.0
    %v1806 = vsel %vm1774, %v324, 0.0
    %v1807 = vsel %vm1775, %v324, 0.0
    %v1808 = vsel %vm1776, %v324, 0.0
    %v1809 = vsel %vm1777, %v328, 0.0
    %v1810 = vsel %vm1778, %v328, 0.0
    %v1811 = vsel %vm1779, %v328, 0.0
    %v1812 = vsel %vm1780, %v328, 0.0
    %v1813 = vsel %vm1781, %v332, 0.0
    %v1814 = vsel %vm1782, %v332, 0.0
    %v1815 = vsel %vm1783, %v332, 0.0
    %v1816 = vsel %vm1784, %v332, 0.0
    %v1817 = vsel %vm1785, %v336, 0.0
    %v1818 = vsel %vm1786, %v336, 0.0
    %v1819 = vsel %vm1787, %v336, 0.0
    %v1820 = vsel %vm1788, %v336, 0.0
    %v1821 = vsel %vm1789, %v340, 0.0
    %v1822 = vsel %vm1790, %v340, 0.0
    %v1823 = vsel %vm1791, %v340, 0.0
    %v1824 = vsel %vm1792, %v340, 0.0
    %v1825 = vsel %vm1793, %v344, 0.0
    %v1826 = vsel %vm1794, %v344, 0.0
    %v1827 = vsel %vm1795, %v344, 0.0
    %v1828 = vsel %vm1796, %v344, 0.0
    %v1829 = vsel %vm1797, %v348, 0.0
    %v1830 = vsel %vm1798, %v348, 0.0
    %v1831 = vsel %vm1799, %v348, 0.0
    %v1832 = vsel %vm1800, %v348, 0.0
    %v1833 = vsel %vm1801, %v352, 0.0
    %v1834 = vsel %vm1802, %v352, 0.0
    %v1835 = vsel %vm1803, %v352, 0.0
    %v1836 = vsel %vm1804, %v352, 0.0
    %v1837 = vsel %vm417, %v1805, 0.0
    %1838 = vadd.xlane.f32.xlu0 %v1837
    %v1839 = vpop.xlane.xlu0 %1838
    %v1840 = vsel %vm417, %v1806, 0.0
    %1841 = vadd.xlane.f32.xlu0 %v1840
    %v1842 = vpop.xlane.xlu0 %1841
    %v1843 = vsel %vm417, %v1807, 0.0
    %1844 = vadd.xlane.f32.xlu0 %v1843
    %v1845 = vpop.xlane.xlu0 %1844
    %v1846 = vsel %vm1182, %v1808, 0.0
    %1847 = vadd.xlane.f32.xlu0 %v1846
    %v1848 = vpop.xlane.xlu0 %1847
    %v1849 = vsel %vm417, %v1809, 0.0
    %1850 = vadd.xlane.f32.xlu0 %v1849
    %v1851 = vpop.xlane.xlu0 %1850
    %v1852 = vsel %vm417, %v1810, 0.0
    %1853 = vadd.xlane.f32.xlu0 %v1852
    %v1854 = vpop.xlane.xlu0 %1853
    %v1855 = vsel %vm417, %v1811, 0.0
    %1856 = vadd.xlane.f32.xlu0 %v1855
    %v1857 = vpop.xlane.xlu0 %1856
    %v1858 = vsel %vm1182, %v1812, 0.0
    %1859 = vadd.xlane.f32.xlu0 %v1858
    %v1860 = vpop.xlane.xlu0 %1859
    %v1861 = vsel %vm417, %v1813, 0.0
    %1862 = vadd.xlane.f32.xlu0 %v1861
    %v1863 = vpop.xlane.xlu0 %1862
    %v1864 = vsel %vm417, %v1814, 0.0
    %1865 = vadd.xlane.f32.xlu0 %v1864
    %v1866 = vpop.xlane.xlu0 %1865
    %v1867 = vsel %vm417, %v1815, 0.0
    %1868 = vadd.xlane.f32.xlu0 %v1867
    %v1869 = vpop.xlane.xlu0 %1868
    %v1870 = vsel %vm1182, %v1816, 0.0
    %1871 = vadd.xlane.f32.xlu0 %v1870
    %v1872 = vpop.xlane.xlu0 %1871
    %v1873 = vsel %vm417, %v1817, 0.0
    %1874 = vadd.xlane.f32.xlu0 %v1873
    %v1875 = vpop.xlane.xlu0 %1874
    %v1876 = vsel %vm417, %v1818, 0.0
    %1877 = vadd.xlane.f32.xlu0 %v1876
    %v1878 = vpop.xlane.xlu0 %1877
    %v1879 = vsel %vm417, %v1819, 0.0
    %1880 = vadd.xlane.f32.xlu0 %v1879
    %v1881 = vpop.xlane.xlu0 %1880
    %v1882 = vsel %vm1182, %v1820, 0.0
    %1883 = vadd.xlane.f32.xlu0 %v1882
    %v1884 = vpop.xlane.xlu0 %1883
    %v1885 = vsel %vm417, %v1821, 0.0
    %1886 = vadd.xlane.f32.xlu0 %v1885
    %v1887 = vpop.xlane.xlu0 %1886
    %v1888 = vsel %vm417, %v1822, 0.0
    %1889 = vadd.xlane.f32.xlu0 %v1888
    %v1890 = vpop.xlane.xlu0 %1889
    %v1891 = vsel %vm417, %v1823, 0.0
    %1892 = vadd.xlane.f32.xlu0 %v1891
    %v1893 = vpop.xlane.xlu0 %1892
    %v1894 = vsel %vm1182, %v1824, 0.0
    %1895 = vadd.xlane.f32.xlu0 %v1894
    %v1896 = vpop.xlane.xlu0 %1895
    %v1897 = vsel %vm417, %v1825, 0.0
    %1898 = vadd.xlane.f32.xlu0 %v1897
    %v1899 = vpop.xlane.xlu0 %1898
    %v1900 = vsel %vm417, %v1826, 0.0
    %1901 = vadd.xlane.f32.xlu0 %v1900
    %v1902 = vpop.xlane.xlu0 %1901
    %v1903 = vsel %vm417, %v1827, 0.0
    %1904 = vadd.xlane.f32.xlu0 %v1903
    %v1905 = vpop.xlane.xlu0 %1904
    %v1906 = vsel %vm1182, %v1828, 0.0
    %1907 = vadd.xlane.f32.xlu0 %v1906
    %v1908 = vpop.xlane.xlu0 %1907
    %v1909 = vsel %vm417, %v1829, 0.0
    %1910 = vadd.xlane.f32.xlu0 %v1909
    %v1911 = vpop.xlane.xlu0 %1910
    %v1912 = vsel %vm417, %v1830, 0.0
    %1913 = vadd.xlane.f32.xlu0 %v1912
    %v1914 = vpop.xlane.xlu0 %1913
    %v1915 = vsel %vm417, %v1831, 0.0
    %1916 = vadd.xlane.f32.xlu0 %v1915
    %v1917 = vpop.xlane.xlu0 %1916
    %v1918 = vsel %vm1182, %v1832, 0.0
    %1919 = vadd.xlane.f32.xlu0 %v1918
    %v1920 = vpop.xlane.xlu0 %1919
    %v1921 = vsel %vm417, %v1833, 0.0
    %1922 = vadd.xlane.f32.xlu0 %v1921
    %v1923 = vpop.xlane.xlu0 %1922
    %v1924 = vsel %vm417, %v1834, 0.0
    %1925 = vadd.xlane.f32.xlu0 %v1924
    %v1926 = vpop.xlane.xlu0 %1925
    %v1927 = vsel %vm417, %v1835, 0.0
    %1928 = vadd.xlane.f32.xlu0 %v1927
    %v1929 = vpop.xlane.xlu0 %1928
    %v1930 = vsel %vm1182, %v1836, 0.0
    %1931 = vadd.xlane.f32.xlu0 %v1930
    %v1932 = vpop.xlane.xlu0 %1931
    %v1965 = vlaneseq
    %v1966 = vshrl.u32 %v1965, 7
    %v1967 = vsub.s32 %v651, %v1966
    %v1968 = vrot.slane %v1839, %v1967
    %v1969 = vlaneseq
    %v1970 = vshrl.u32 %v1969, 7
    %v1971 = vsub.s32 %v656, %v1970
    %v1972 = vrot.slane %v1842, %v1971
    %v1973 = vsel %vm661, %v1972, %v1968
    %v1974 = vlaneseq
    %v1975 = vshrl.u32 %v1974, 7
    %v1976 = vsub.s32 %v663, %v1975
    %v1977 = vrot.slane %v1845, %v1976
    %v1978 = vsel %vm668, %v1977, %v1973
    %v1979 = vlaneseq
    %v1980 = vshrl.u32 %v1979, 7
    %v1981 = vsub.s32 %v670, %v1980
    %v1982 = vrot.slane %v1848, %v1981
    %v1983 = vsel %vm675, %v1982, %v1978
    %v1984 = vlaneseq
    %v1985 = vshrl.u32 %v1984, 7
    %v1986 = vsub.s32 %v651, %v1985
    %v1987 = vrot.slane %v1851, %v1986
    %v1988 = vlaneseq
    %v1989 = vshrl.u32 %v1988, 7
    %v1990 = vsub.s32 %v656, %v1989
    %v1991 = vrot.slane %v1854, %v1990
    %v1992 = vsel %vm661, %v1991, %v1987
    %v1993 = vlaneseq
    %v1994 = vshrl.u32 %v1993, 7
    %v1995 = vsub.s32 %v663, %v1994
    %v1996 = vrot.slane %v1857, %v1995
    %v1997 = vsel %vm668, %v1996, %v1992
    %v1998 = vlaneseq
    %v1999 = vshrl.u32 %v1998, 7
    %v2000 = vsub.s32 %v670, %v1999
    %v2001 = vrot.slane %v1860, %v2000
    %v2002 = vsel %vm675, %v2001, %v1997
    %v2003 = vlaneseq
    %v2004 = vshrl.u32 %v2003, 7
    %v2005 = vsub.s32 %v651, %v2004
    %v2006 = vrot.slane %v1863, %v2005
    %v2007 = vlaneseq
    %v2008 = vshrl.u32 %v2007, 7
    %v2009 = vsub.s32 %v656, %v2008
    %v2010 = vrot.slane %v1866, %v2009
    %v2011 = vsel %vm661, %v2010, %v2006
    %v2012 = vlaneseq
    %v2013 = vshrl.u32 %v2012, 7
    %v2014 = vsub.s32 %v663, %v2013
    %v2015 = vrot.slane %v1869, %v2014
    %v2016 = vsel %vm668, %v2015, %v2011
    %v2017 = vlaneseq
    %v2018 = vshrl.u32 %v2017, 7
    %v2019 = vsub.s32 %v670, %v2018
    %v2020 = vrot.slane %v1872, %v2019
    %v2021 = vsel %vm675, %v2020, %v2016
    %v2022 = vlaneseq
    %v2023 = vshrl.u32 %v2022, 7
    %v2024 = vsub.s32 %v651, %v2023
    %v2025 = vrot.slane %v1875, %v2024
    %v2026 = vlaneseq
    %v2027 = vshrl.u32 %v2026, 7
    %v2028 = vsub.s32 %v656, %v2027
    %v2029 = vrot.slane %v1878, %v2028
    %v2030 = vsel %vm661, %v2029, %v2025
    %v2031 = vlaneseq
    %v2032 = vshrl.u32 %v2031, 7
    %v2033 = vsub.s32 %v663, %v2032
    %v2034 = vrot.slane %v1881, %v2033
    %v2035 = vsel %vm668, %v2034, %v2030
    %v2036 = vlaneseq
    %v2037 = vshrl.u32 %v2036, 7
    %v2038 = vsub.s32 %v670, %v2037
    %v2039 = vrot.slane %v1884, %v2038
    %v2040 = vsel %vm675, %v2039, %v2035
    %v2041 = vlaneseq
    %v2042 = vshrl.u32 %v2041, 7
    %v2043 = vsub.s32 %v651, %v2042
    %v2044 = vrot.slane %v1887, %v2043
    %v2045 = vlaneseq
    %v2046 = vshrl.u32 %v2045, 7
    %v2047 = vsub.s32 %v656, %v2046
    %v2048 = vrot.slane %v1890, %v2047
    %v2049 = vsel %vm661, %v2048, %v2044
    %v2050 = vlaneseq
    %v2051 = vshrl.u32 %v2050, 7
    %v2052 = vsub.s32 %v663, %v2051
    %v2053 = vrot.slane %v1893, %v2052
    %v2054 = vsel %vm668, %v2053, %v2049
    %v2055 = vlaneseq
    %v2056 = vshrl.u32 %v2055, 7
    %v2057 = vsub.s32 %v670, %v2056
    %v2058 = vrot.slane %v1896, %v2057
    %v2059 = vsel %vm675, %v2058, %v2054
    %v2060 = vlaneseq
    %v2061 = vshrl.u32 %v2060, 7
    %v2062 = vsub.s32 %v651, %v2061
    %v2063 = vrot.slane %v1899, %v2062
    %v2064 = vlaneseq
    %v2065 = vshrl.u32 %v2064, 7
    %v2066 = vsub.s32 %v656, %v2065
    %v2067 = vrot.slane %v1902, %v2066
    %v2068 = vsel %vm661, %v2067, %v2063
    %v2069 = vlaneseq
    %v2070 = vshrl.u32 %v2069, 7
    %v2071 = vsub.s32 %v663, %v2070
    %v2072 = vrot.slane %v1905, %v2071
    %v2073 = vsel %vm668, %v2072, %v2068
    %v2074 = vlaneseq
    %v2075 = vshrl.u32 %v2074, 7
    %v2076 = vsub.s32 %v670, %v2075
    %v2077 = vrot.slane %v1908, %v2076
    %v2078 = vsel %vm675, %v2077, %v2073
    %v2079 = vlaneseq
    %v2080 = vshrl.u32 %v2079, 7
    %v2081 = vsub.s32 %v651, %v2080
    %v2082 = vrot.slane %v1911, %v2081
    %v2083 = vlaneseq
    %v2084 = vshrl.u32 %v2083, 7
    %v2085 = vsub.s32 %v656, %v2084
    %v2086 = vrot.slane %v1914, %v2085
    %v2087 = vsel %vm661, %v2086, %v2082
    %v2088 = vlaneseq
    %v2089 = vshrl.u32 %v2088, 7
    %v2090 = vsub.s32 %v663, %v2089
    %v2091 = vrot.slane %v1917, %v2090
    %v2092 = vsel %vm668, %v2091, %v2087
    %v2093 = vlaneseq
    %v2094 = vshrl.u32 %v2093, 7
    %v2095 = vsub.s32 %v670, %v2094
    %v2096 = vrot.slane %v1920, %v2095
    %v2097 = vsel %vm675, %v2096, %v2092
    %v2098 = vlaneseq
    %v2099 = vshrl.u32 %v2098, 7
    %v2100 = vsub.s32 %v651, %v2099
    %v2101 = vrot.slane %v1923, %v2100
    %v2102 = vlaneseq
    %v2103 = vshrl.u32 %v2102, 7
    %v2104 = vsub.s32 %v656, %v2103
    %v2105 = vrot.slane %v1926, %v2104
    %v2106 = vsel %vm661, %v2105, %v2101
    %v2107 = vlaneseq
    %v2108 = vshrl.u32 %v2107, 7
    %v2109 = vsub.s32 %v663, %v2108
    %v2110 = vrot.slane %v1929, %v2109
    %v2111 = vsel %vm668, %v2110, %v2106
    %v2112 = vlaneseq
    %v2113 = vshrl.u32 %v2112, 7
    %v2114 = vsub.s32 %v670, %v2113
    %v2115 = vrot.slane %v1932, %v2114
    %v2116 = vsel %vm675, %v2115, %v2111
    %v2117 = vsel %vm936, %v2002, %v1983
    %v2118 = vsel %vm938, %v2021, %v2117
    %v2119 = vsel %vm940, %v2040, %v2118
    %v2120 = vsel %vm942, %v2059, %v2119
    %v2121 = vsel %vm944, %v2078, %v2120
    %v2122 = vsel %vm946, %v2097, %v2121
    %v2123 = vsel %vm948, %v2116, %v2122
    %v2124 = vsel %vm1465, %v2123, 0
    %2126 = vmatprep.subr.mxu0 0.0
    %2127 = vmatpush1.msra.mxu0 %v1270
    %2128 = vmatprep.subr.mxu0 0.0
    %2129 = vmatpush1.msra.mxu0 %v1271
    %2130 = vmatprep.subr.mxu0 0.0
    %2131 = vmatpush1.msra.mxu0 %v1272
    %2132 = vmatprep.subr.mxu0 0.0
    %2133 = vmatpush1.msra.mxu0 %v1470
    %2134 = vmatprep.subr.mxu0 0.0
    %2135 = vmatpush1.msra.mxu0 0.0
    %2136 = vmatprep.subr.mxu0 0.0
    %2137 = vmatpush1.msra.mxu0 0.0
    %2138 = vmatprep.subr.mxu0 0.0
    %2139 = vmatpush1.msra.mxu0 0.0
    %2140 = vmatprep.subr.mxu0 0.0
    %2141 = vmatpush1.msra.mxu0 0.0
    %2142 = vmatprep.subr.mxu0 0.0
    %2143 = vmatpush1.msra.mxu0 0.0
    %2144 = vmatprep.subr.mxu0 0.0
    %2145 = vmatpush1.msra.mxu0 0.0
    %2146 = vmatprep.subr.mxu0 0.0
    %2147 = vmatpush1.msra.mxu0 0.0
    %2148 = vmatprep.subr.mxu0 0.0
    %2149 = vmatpush1.msra.mxu0 0.0
    %2150 = vmatprep.subr.mxu0 0.0
    %2151 = vmatpush1.msra.mxu0 0.0
    %2152 = vmatprep.subr.mxu0 0.0
    %2153 = vmatpush1.msra.mxu0 0.0
    %2154 = vmatprep.subr.mxu0 0.0
    %2155 = vmatpush1.msra.mxu0 0.0
    %2156 = vmatprep.subr.mxu0 0.0
    %2157 = vmatpush1.msra.mxu0 0.0
    %2158 = vmatprep.subr.mxu0 0.0
    %2159 = vmatpush1.msra.mxu0 0.0
    %2160 = vmatprep.subr.mxu0 0.0
    %2161 = vmatpush1.msra.mxu0 0.0
    %2162 = vmatprep.subr.mxu0 0.0
    %2163 = vmatpush1.msra.mxu0 0.0
    %2164 = vmatprep.subr.mxu0 0.0
    %2165 = vmatpush1.msra.mxu0 0.0
    %2166 = vmatprep.subr.mxu0 0.0
    %2167 = vmatpush1.msra.mxu0 0.0
    %2168 = vmatprep.subr.mxu0 0.0
    %2169 = vmatpush1.msra.mxu0 0.0
    %2170 = vmatprep.subr.mxu0 0.0
    %2171 = vmatpush1.msra.mxu0 0.0
    %2172 = vmatprep.subr.mxu0 0.0
    %2173 = vmatpush1.msra.mxu0 0.0
    %2174 = vmatprep.subr.mxu0 0.0
    %2175 = vmatpush1.msra.mxu0 0.0
    %2176 = vmatprep.subr.mxu0 0.0
    %2177 = vmatpush1.msra.mxu0 0.0
    %2178 = vmatprep.subr.mxu0 0.0
    %2179 = vmatpush1.msra.mxu0 0.0
    %2180 = vmatprep.subr.mxu0 0.0
    %2181 = vmatpush1.msra.mxu0 0.0
    %2182 = vmatprep.subr.mxu0 0.0
    %2183 = vmatpush1.msra.mxu0 0.0
    %2184 = vmatprep.subr.mxu0 0.0
    %2185 = vmatpush1.msra.mxu0 0.0
    %2186 = vmatprep.subr.mxu0 0.0
    %2187 = vmatpush1.msra.mxu0 0.0
    %2188 = vmatprep.subr.mxu0 0.0
    %2189 = vmatpush1.msra.mxu0 0.0
    %2190 = vmatprep.mubr.f32.mxu0 0.0
    %2191 = vmatmul.mubr.f32.gmra.mrb[0].mxu0 %v2124
    %v2192 = vpop.f32.mrb[0].mxu0
    %v2193 = vadd.f32 0.0, %v2192
    %v2194 = vpop.f32.mrb[0].mxu0
    %2195 = vdwg.mxu0
    %v2197 = vsel %vm1542, %v2193, 0
    %2199 = vmatprep.subr.mxu0 0.0
    %2200 = vmatpush1.msra.mxu0 %v123
    %2201 = vmatprep.subr.mxu0 0.0
    %2202 = vmatpush1.msra.mxu0 %v124
    %2203 = vmatprep.subr.mxu0 0.0
    %2204 = vmatpush1.msra.mxu0 0.0
    %2205 = vmatprep.subr.mxu0 0.0
    %2206 = vmatpush1.msra.mxu0 0.0
    %2207 = vmatprep.subr.mxu0 0.0
    %2208 = vmatpush1.msra.mxu0 0.0
    %2209 = vmatprep.subr.mxu0 0.0
    %2210 = vmatpush1.msra.mxu0 0.0
    %2211 = vmatprep.subr.mxu0 0.0
    %2212 = vmatpush1.msra.mxu0 0.0
    %2213 = vmatprep.subr.mxu0 0.0
    %2214 = vmatpush1.msra.mxu0 0.0
    %2215 = vmatprep.subr.mxu0 0.0
    %2216 = vmatpush1.msra.mxu0 0.0
    %2217 = vmatprep.subr.mxu0 0.0
    %2218 = vmatpush1.msra.mxu0 0.0
    %2219 = vmatprep.subr.mxu0 0.0
    %2220 = vmatpush1.msra.mxu0 0.0
    %2221 = vmatprep.subr.mxu0 0.0
    %2222 = vmatpush1.msra.mxu0 0.0
    %2223 = vmatprep.subr.mxu0 0.0
    %2224 = vmatpush1.msra.mxu0 0.0
    %2225 = vmatprep.subr.mxu0 0.0
    %2226 = vmatpush1.msra.mxu0 0.0
    %2227 = vmatprep.subr.mxu0 0.0
    %2228 = vmatpush1.msra.mxu0 0.0
    %2229 = vmatprep.subr.mxu0 0.0
    %2230 = vmatpush1.msra.mxu0 0.0
    %2231 = vmatprep.subr.mxu0 0.0
    %2232 = vmatpush1.msra.mxu0 0.0
    %2233 = vmatprep.subr.mxu0 0.0
    %2234 = vmatpush1.msra.mxu0 0.0
    %2235 = vmatprep.subr.mxu0 0.0
    %2236 = vmatpush1.msra.mxu0 0.0
    %2237 = vmatprep.subr.mxu0 0.0
    %2238 = vmatpush1.msra.mxu0 0.0
    %2239 = vmatprep.subr.mxu0 0.0
    %2240 = vmatpush1.msra.mxu0 0.0
    %2241 = vmatprep.subr.mxu0 0.0
    %2242 = vmatpush1.msra.mxu0 0.0
    %2243 = vmatprep.subr.mxu0 0.0
    %2244 = vmatpush1.msra.mxu0 0.0
    %2245 = vmatprep.subr.mxu0 0.0
    %2246 = vmatpush1.msra.mxu0 0.0
    %2247 = vmatprep.subr.mxu0 0.0
    %2248 = vmatpush1.msra.mxu0 0.0
    %2249 = vmatprep.subr.mxu0 0.0
    %2250 = vmatpush1.msra.mxu0 0.0
    %2251 = vmatprep.subr.mxu0 0.0
    %2252 = vmatpush1.msra.mxu0 0.0
    %2253 = vmatprep.subr.mxu0 0.0
    %2254 = vmatpush1.msra.mxu0 0.0
    %2255 = vmatprep.subr.mxu0 0.0
    %2256 = vmatpush1.msra.mxu0 0.0
    %2257 = vmatprep.subr.mxu0 0.0
    %2258 = vmatpush1.msra.mxu0 0.0
    %2259 = vmatprep.subr.mxu0 0.0
    %2260 = vmatpush1.msra.mxu0 0.0
    %2261 = vmatprep.subr.mxu0 0.0
    %2262 = vmatpush1.msra.mxu0 0.0
    %2263 = vmatprep.mubr.f32.mxu0 0.0
    %2264 = vmatmul.mubr.f32.gmra.mrb[0].mxu0 %v2197
    %v2265 = vpop.f32.mrb[0].mxu0
    %v2266 = vadd.f32 0.0, %v2265
    %v2267 = vpop.f32.mrb[0].mxu0
    %2268 = vdwg.mxu0
    %v2269 = vadd.f32 %v1687, %v2266
    %v2270 = vmul.f32 %v2269, 0.125
    %v2271 = vld [vmem:[#allocation13] sm:$0x1]
    %v2273 = vlaneseq
    %v2274 = vshrl.u32 %v2273, 7
    %v2275 = vsub.s32 0, %v2274
    %v2276 = vrot.slane %v2271, %v2275
    %v2278 = vadd.f32 %v2270, %v2276
    %v2279 = vsel %vm417, %v2278, -inf
    %2280 = vmax.xlane.f32.xlu0 %v2279
    %v2281 = vpop.xlane.xlu0 %2280
    %vm2282 = vcmp.ge.f32.partialorder %v2278, %v2281
    %v2283 = vsel %vm2282, %v651, 8
    %v2284 = vsel %vm417, %v2283, 2147483647
    %v2285 = vand.u32 %v2284, 65535
    %v2286 = vshra.s32 %v2284, 16
    %v2287 = vcvt.s32.f32 %v2285
    %v2288 = vcvt.s32.f32 %v2286
    %2289 = vmin.xlane.f32.xlu0 %v2288
    %v2290 = vpop.xlane.xlu0 %2289
    %vm2291 = vcmp.eq.f32.partialorder %v2288, %v2290
    %v2292 = vsel %vm2291, %v2287, inf
    %2293 = vmin.xlane.f32.xlu0 %v2292
    %v2294 = vpop.xlane.xlu0 %2293
    %v2295 = vcvt.f32.s32 %v2294
    %v2296 = vcvt.f32.s32 %v2290
    %v2297 = vshll.u32 %v2296, 16
    %v2298 = vadd.s32 %v2297, %v2295
    %vm2299 = vcmask 7168
    %2300 = vst.msk [vmem:[#allocation14] sm:$0xff] %vm2299, %v2298
    // Predicated region
    $region58: #{tpu_custom_call.1} parent=1 // pred_check
      _
    $region59: #{tpu_custom_call.1} parent=1 // pred_check_branch
      %2302 = sbr.rel (0) target = $region61
    $region60: #{tpu_custom_call.1} parent=1 // pred_region
      %s2304 = ssub.s32 128, 128
      %2305 = vsyncadd [#allocation4], %s2304
      %s2307 = sshll.u32 [#allocation14], 4
      %s2308 = int_to_ptr.vmem [resolvable:$true] %s2307
      %2310 = dma.vmem_to_hbm [thread:$0]  %s2308, 128, %s7, [#allocation4]
    $region61: #{tpu_custom_call.1} parent=1 // pred_fallthru
      _
    // Predicated region
    $region62: #{tpu_custom_call.1} parent=1 // pred_check
      _
    $region63: #{tpu_custom_call.1} parent=1 // pred_check_branch
      %2312 = sbr.rel (0) target = $region65
    $region64: #{tpu_custom_call.1} parent=1 // pred_region
      %2313 = dma.done [#allocation4], 128
    $region65: #{tpu_custom_call.1} parent=1 // pred_fallthru
      _
    %2314 = vsyncpa [#allocation3], 1
    %2315 = vsyncpa [#allocation6], 1
    %2316 = vsyncpa [#allocation9], 1
    %2317 = vsyncpa [#allocation12], 1
    %2318 = vsyncpa [#allocation4], 1

</llo_original>
